<compile_context>
chip_gen: v7x
topology: tpu7x:2x2x1
jax: 0.10.0
libtpu: 0.0.40
codegen_flags: <defaults>
</compile_context>

<pallas_src>
import math
import functools

import jax
import jax.numpy as jnp
from jax import lax
from jax.experimental import pallas as pl
from jax.experimental.pallas import tpu as pltpu

# ----------------------------- model dims -----------------------------------
B = 4        # batch
T = 8        # time
E = 32       # embedding dim
H = 32       # LSTM hidden dim
V = 128      # vocab size (lane-friendly)

B_PAD = 8            # batch padded to a full sublane group
TB = T * B_PAD       # flattened (time-major) token rows = 64
G = 4 * H            # gate lanes = 128
OUT_LANES = 128      # lane-dense output width

LSM_WEIGHT = 0.1                 # label smoothing
LENGTH_NORMALIZED_LOSS = False
IGNORE_ID = -1


# ----------------------- single fused forward kernel ------------------------
def rnnlm_fused_kernel(idlab_ref, vw_ref, wei_ref, whh_ref, bl_ref, wp_ref, bp_ref,
                       scal_ref, ppl_ref,
                       *, confidence, smooth_val, const_term, length_norm):
    f32 = jnp.float32
    bf16 = jnp.bfloat16

    idlab = idlab_ref[...]                                 # [TB, 2] int32, row = t*B_PAD + b
    ids_col = idlab[:, 0:1]                                # [TB, 1] token ids (-1 on padding rows)
    lab_col = idlab[:, 1:2]                                # [TB, 1] labels   (-1 = ignore)

    iota_v = lax.broadcasted_iota(jnp.int32, (TB, V), 1)   # [TB, V]

    # ---- embedding gather fused with the input gate projection (one MXU push) ----
    # onehot(ids) @ (embed @ w_ih); padding rows (id=-1) produce all-zero onehot rows.
    onehot_ids = (iota_v == ids_col).astype(bf16)          # [TB, V]
    x_gates = jnp.dot(onehot_ids, wei_ref[...],
                      preferred_element_type=f32) + bl_ref[...]   # [TB, 4H] f32

    # ---- LSTM recurrence: only h @ w_hh + one full-vreg tanh on the serial chain --
    w_hh = whh_ref[...]                                    # [H, 4H] bf16 (hoisted)
    lane_g = lax.broadcasted_iota(jnp.int32, (1, G), 1)
    is_g = jnp.logical_and(lane_g >= 2 * H, lane_g < 3 * H)
    g_scale = jnp.where(is_g, 1.0, 0.5).astype(f32)        # 0.5 on i/f/o lanes, 1.0 on g lanes
    g_off = jnp.where(is_g, 0.0, 0.5).astype(f32)          # sigmoid(x) = 0.5*tanh(0.5x) + 0.5

    h = jnp.zeros((B_PAD, H), f32)
    c = jnp.zeros((B_PAD, H), f32)
    h_rows = []
    for t in range(T):                                     # static unroll; slices stay in vregs
        gates = x_gates[t * B_PAD:(t + 1) * B_PAD, :] + jnp.dot(
            h.astype(bf16), w_hh, preferred_element_type=f32)     # [B_PAD, 4H]
        act = jnp.tanh(gates * g_scale) * g_scale + g_off         # one EUP push for all 4 gates
        i = act[:, 0 * H:1 * H]
        f = act[:, 1 * H:2 * H]
        g = act[:, 2 * H:3 * H]
        o = act[:, 3 * H:4 * H]
        c = f * c + i * g
        h = o * jnp.tanh(c)
        h_rows.append(h)
    hid = jnp.concatenate(h_rows, axis=0)                  # [TB, H], time-major, no VMEM round-trip

    # ---- projection + log-softmax + KL (logp never materialized) ------------------
    logits = jnp.dot(hid.astype(bf16), wp_ref[...],
                     preferred_element_type=f32) + bp_ref[...]    # [TB, V] f32
    m = jnp.max(logits, axis=-1, keepdims=True)
    z = logits - m
    lse = jnp.log(jnp.sum(jnp.exp(z), axis=-1, keepdims=True))    # [TB, 1]
    sum_z = jnp.sum(z, axis=-1, keepdims=True)                    # [TB, 1]

    mask = (lab_col != IGNORE_ID).astype(f32)                     # [TB, 1]
    tgt = jnp.where(lab_col == IGNORE_ID, 0, lab_col)
    onehot_tgt = (iota_v == tgt).astype(f32)
    z_tgt = jnp.sum(onehot_tgt * z, axis=-1, keepdims=True)       # [TB, 1]
    logp_tgt = z_tgt - lse                                        # logp at target
    sum_logp = sum_z - float(V) * lse                             # sum_v logp

    kl = (const_term
          - (confidence - smooth_val) * logp_tgt
          - smooth_val * sum_logp) * mask                         # [TB, 1]

    # ---- per-sequence reduction + full loss/ppl epilogue, all in-kernel ------------
    row_ids = lax.broadcasted_iota(jnp.int32, (TB, OUT_LANES), 0)
    lane_ids = lax.broadcasted_iota(jnp.int32, (TB, OUT_LANES), 1)
    sel = ((row_ids & (B_PAD - 1)) == lane_ids).astype(f32)       # token row -> its sequence lane
    seq_kl = jnp.sum(kl * sel, axis=0, keepdims=True)             # [1,128] per-seq KL (lanes 0..B-1)
    seq_cnt = jnp.sum(mask * sel, axis=0, keepdims=True)          # [1,128] per-seq valid tokens

    total_kl = jnp.sum(seq_kl, axis=1, keepdims=True)             # [1,1]
    vw_f = vw_ref[0]                                              # f32 scalar: sum(labels_length)
    if length_norm:
        denom = jnp.maximum(jnp.sum(seq_cnt, axis=1, keepdims=True), 1.0)
        loss = total_kl / denom
        total_ppl = jnp.exp(loss)
    else:
        loss = total_kl * (1.0 / float(B))
        total_ppl = jnp.exp(loss * float(B) / vw_f)

    # per-seq ppl (lanes >= B come out as exp(0)=1 and are sliced away in the wrapper)
    ppl_ref[...] = jnp.exp(seq_kl / jnp.maximum(seq_cnt, 1.0))    # [1,128]

    lane1 = lax.broadcasted_iota(jnp.int32, (1, OUT_LANES), 1)
    scal_ref[...] = (jnp.where(lane1 == 0, loss, 0.0)             # lane 0: loss
                     + jnp.where(lane1 == 1, total_ppl, 0.0)      # lane 1: total_ppl
                     + jnp.where(lane1 == 2, vw_f, 0.0))          # lane 2: valid_words (f32)


def _run_fused(idlab_tm, vw_f32, prep):
    confidence = 1.0 - LSM_WEIGHT
    smooth_val = LSM_WEIGHT / (V - 1)
    const_term = ((confidence * math.log(confidence)) if confidence > 0.0 else 0.0) + \
                 (((V - 1) * smooth_val * math.log(smooth_val)) if smooth_val > 0.0 else 0.0)
    kern = functools.partial(rnnlm_fused_kernel,
                             confidence=confidence, smooth_val=smooth_val,
                             const_term=const_term, length_norm=LENGTH_NORMALIZED_LOSS)
    vmem = lambda: pl.BlockSpec(memory_space=pltpu.MemorySpace.VMEM)
    smem = lambda: pl.BlockSpec(memory_space=pltpu.MemorySpace.SMEM)
    return pl.pallas_call(
        kern,
        out_shape=(jax.ShapeDtypeStruct((1, OUT_LANES), jnp.float32),   # scalars (loss/total_ppl/vw)
                   jax.ShapeDtypeStruct((1, OUT_LANES), jnp.float32)),  # per-seq ppl
        in_specs=[vmem(), smem(), vmem(), vmem(), vmem(), vmem(), vmem()],
        out_specs=(vmem(), vmem()),
    )(idlab_tm, vw_f32, prep['w_embih'], prep['w_hh'], prep['b_lstm'],
      prep['w_proj'], prep['b_proj'])


# ------------------------- one-time parameter prep ---------------------------
def prepare_params(params):
    """Done once at init, NOT per forward call: fold embed @ w_ih into a single
    [V, 4H] matrix (embedding gather + input projection become one MXU push) and
    cast all MXU operands to bf16 (f32 accumulation is kept in the kernel)."""
    w_embih = jnp.dot(params['embed'], params['w_ih'],
                      preferred_element_type=jnp.float32).astype(jnp.bfloat16)   # [V, 4H]
    return {
        'w_embih': w_embih,
        'w_hh': params['w_hh'].astype(jnp.bfloat16),      # [H, 4H]
        'b_lstm': params['b_lstm'].astype(jnp.float32),   # [1, 4H]
        'w_proj': params['w_proj'].astype(jnp.bfloat16),  # [H, V]
        'b_proj': params['b_proj'].astype(jnp.float32),   # [1, V]
    }


# ----------------------------- full forward ----------------------------------
def rnnlm_forward(prep, input_ids, input_length, labels, labels_length):
    """Mirrors RNNLM.forward -> (loss, ppl, total_ppl, valid_words)."""
    del input_length  # lengths only affect packing in torch; padded steps are masked via labels

    valid_words = labels_length.sum()
    # Minimal per-call prep (a couple of tiny fused XLA int ops): time-major [TB, 2]
    # (ids | labels) column pair, batch padded to a full sublane group with IGNORE_ID.
    idlab = jnp.stack([input_ids.astype(jnp.int32), labels.astype(jnp.int32)], axis=-1)  # [B,T,2]
    idlab_pad = jnp.full((B_PAD, T, 2), IGNORE_ID, jnp.int32).at[:B].set(idlab)
    idlab_tm = jnp.transpose(idlab_pad, (1, 0, 2)).reshape(TB, 2)                        # row = t*B_PAD + b
    vw_f32 = valid_words.astype(jnp.float32).reshape(1)

    scal, ppl_v = _run_fused(idlab_tm, vw_f32, prep)
    loss = scal[0, 0]
    total_ppl = scal[0, 1]
    ppl = ppl_v[0, :B]
    return loss, ppl, total_ppl, valid_words


# ----------------------------- pure-JAX reference ----------------------------
def reference_forward(params, input_ids, labels, labels_length):
    emb = params['embed'][input_ids]                          # [B, T, E]

    def step(carry, x_t):
        h, c = carry
        gates = x_t @ params['w_ih'] + h @ params['w_hh'] + params['b_lstm'][0]
        i = jax.nn.sigmoid(gates[:, 0 * H:1 * H])
        f = jax.nn.sigmoid(gates[:, 1 * H:2 * H])
        g = jnp.tanh(gates[:, 2 * H:3 * H])
        o = jax.nn.sigmoid(gates[:, 3 * H:4 * H])
        c = f * c + i * g
        h = o * jnp.tanh(c)
        return (h, c), h

    h0 = jnp.zeros((B, H), jnp.float32)
    (_, _), hs = jax.lax.scan(step, (h0, h0), jnp.transpose(emb, (1, 0, 2)))
    hidden = jnp.transpose(hs, (1, 0, 2))                     # [B, T, H]
    logits = jnp.einsum('bth,hv->btv', hidden, params['w_proj']) + params['b_proj'][0]
    logp = jax.nn.log_softmax(logits, axis=-1)

    conf = 1.0 - LSM_WEIGHT
    sm = LSM_WEIGHT / (V - 1)
    mask = (labels != IGNORE_ID).astype(jnp.float32)
    tgt = jnp.where(labels == IGNORE_ID, 0, labels)
    true = jnp.full((B, T, V), sm).at[jnp.arange(B)[:, None], jnp.arange(T)[None, :], tgt].set(conf)
    kl = jnp.sum(jnp.where(true > 0, true * (jnp.log(jnp.where(true > 0, true, 1.0)) - logp), 0.0),
                 axis=-1) * mask
    seq_sum = kl.sum(axis=1)
    total_kl = seq_sum.sum()
    denom = seq_sum.shape[0] if not LENGTH_NORMALIZED_LOSS else mask.sum()
    loss = total_kl / denom
    ppl = jnp.exp(seq_sum / jnp.maximum(mask.sum(axis=1), 1.0))
    valid_words = labels_length.sum()
    total_ppl = jnp.exp(loss * B / valid_words) if not LENGTH_NORMALIZED_LOSS else jnp.exp(loss)
    return loss, ppl, total_ppl, valid_words


# ----------------------------- main ------------------------------------------
if __name__ == "__main__":
    key = jax.random.PRNGKey(0)
    ks = jax.random.split(key, 8)

    params = {
        'embed': 0.1 * jax.random.normal(ks[0], (V, E), jnp.float32),
        'w_ih': 0.1 * jax.random.normal(ks[1], (E, 4 * H), jnp.float32),
        'w_hh': 0.1 * jax.random.normal(ks[2], (H, 4 * H), jnp.float32),
        'b_lstm': 0.1 * jax.random.normal(ks[3], (1, 4 * H), jnp.float32),
        'w_proj': 0.1 * jax.random.normal(ks[4], (H, V), jnp.float32),
        'b_proj': 0.1 * jax.random.normal(ks[5], (1, V), jnp.float32),
    }

    input_ids = jax.random.randint(ks[6], (B, T), 0, V, dtype=jnp.int32)
    labels_length = jnp.array([8, 6, 7, 5], dtype=jnp.int32)
    input_length = labels_length
    raw_labels = jax.random.randint(ks[7], (B, T), 0, V, dtype=jnp.int32)
    t_idx = jnp.arange(T)[None, :]
    labels = jnp.where(t_idx < labels_length[:, None], raw_labels, IGNORE_ID)

    prep = prepare_params(params)          # one-time weight prep (fused embed@w_ih, bf16 casts)

    fwd = jax.jit(rnnlm_forward)
    loss, ppl, total_ppl, valid_words = fwd(prep, input_ids, input_length,
                                            labels, labels_length)
    jax.block_until_ready((loss, ppl, total_ppl, valid_words))

    r_loss, r_ppl, r_total_ppl, r_valid = reference_forward(params, input_ids,
                                                            labels, labels_length)
    # bf16 MXU operands (f32 accumulate) -> loosened tolerances vs the pure-f32 reference
    assert jnp.allclose(loss, r_loss, rtol=1e-2, atol=1e-2), (loss, r_loss)
    assert jnp.allclose(ppl, r_ppl, rtol=1e-2, atol=1e-2), (ppl, r_ppl)
    assert jnp.allclose(total_ppl, r_total_ppl, rtol=1e-2, atol=1e-2), (total_ppl, r_total_ppl)
    assert int(valid_words) == int(r_valid)

    # TODO(synk): LabelSmoothingLoss's per-sequence-loss variant is not shown in the source;
    # per-seq loss is taken as (per-seq KL sum / per-seq valid-token count) so exp() is a ppl.
    print("KERNEL_OK")
</pallas_src>

<mosaic_0001>
module attributes {stable_mosaic.version = 11 : i64} {
  func.func @rnnlm_fused_kernel(%arg0: memref<64x2xi32, #tpu.memory_space<vmem>>, %arg1: memref<1xf32, #tpu.memory_space<smem>>, %arg2: memref<128x128xbf16, #tpu.memory_space<vmem>>, %arg3: memref<32x128xbf16, #tpu.memory_space<vmem>>, %arg4: memref<1x128xf32, #tpu.memory_space<vmem>>, %arg5: memref<32x128xbf16, #tpu.memory_space<vmem>>, %arg6: memref<1x128xf32, #tpu.memory_space<vmem>>, %arg7: memref<1x128xf32, #tpu.memory_space<vmem>>, %arg8: memref<1x128xf32, #tpu.memory_space<vmem>>) attributes {dimension_semantics = [], scalar_prefetch = 0 : i64, scratch_operands = 0 : i64, tpu.core_type = #tpu.core_type<tc>} {
    %c0 = arith.constant 0 : index
    %c0_0 = arith.constant 0 : index
    %0 = vector.load %arg0[%c0, %c0_0] : memref<64x2xi32, #tpu.memory_space<vmem>>, vector<64x2xi32>
    %1 = vector.extract_strided_slice %0 {offsets = [0, 0], sizes = [64, 1], strides = [1, 1]} : vector<64x2xi32> to vector<64x1xi32>
    %2 = vector.extract_strided_slice %0 {offsets = [0, 1], sizes = [64, 1], strides = [1, 1]} : vector<64x2xi32> to vector<64x1xi32>
    %3 = tpu.iota {dimensions = array<i32: 1>} : vector<64x128xi32>
    %4 = vector.broadcast %1 : vector<64x1xi32> to vector<64x128xi32>
    %5 = arith.cmpi eq, %3, %4 : vector<64x128xi32>
    %6 = arith.extui %5 : vector<64x128xi1> to vector<64x128xi32>
    %7 = arith.sitofp %6 : vector<64x128xi32> to vector<64x128xf32>
    %8 = arith.truncf %7 : vector<64x128xf32> to vector<64x128xbf16>
    %c0_1 = arith.constant 0 : index
    %c0_2 = arith.constant 0 : index
    %9 = vector.load %arg2[%c0_1, %c0_2] : memref<128x128xbf16, #tpu.memory_space<vmem>>, vector<128x128xbf16>
    %cst = arith.constant dense<0.000000e+00> : vector<64x128xf32>
    %10 = tpu.matmul %8, %9, %cst {dimension_numbers = #tpu.dot_dimension_numbers<[1], [0], [0], [1], [0, 0, 1, 1], [], []>} : vector<64x128xbf16>, vector<128x128xbf16>, vector<64x128xf32> -> vector<64x128xf32>
    %c0_3 = arith.constant 0 : index
    %c0_4 = arith.constant 0 : index
    %11 = vector.load %arg4[%c0_3, %c0_4] : memref<1x128xf32, #tpu.memory_space<vmem>>, vector<1x128xf32>
    %12 = vector.broadcast %11 : vector<1x128xf32> to vector<64x128xf32>
    %13 = arith.addf %10, %12 : vector<64x128xf32>
    %c0_5 = arith.constant 0 : index
    %c0_6 = arith.constant 0 : index
    %14 = vector.load %arg3[%c0_5, %c0_6] : memref<32x128xbf16, #tpu.memory_space<vmem>>, vector<32x128xbf16>
    %15 = tpu.iota {dimensions = array<i32: 1>} : vector<1x128xi32>
    %c64_i32 = arith.constant 64 : i32
    %16 = vector.broadcast %c64_i32 : i32 to vector<1x128xi32>
    %17 = arith.cmpi sge, %15, %16 : vector<1x128xi32>
    %c96_i32 = arith.constant 96 : i32
    %18 = vector.broadcast %c96_i32 : i32 to vector<1x128xi32>
    %19 = arith.cmpi slt, %15, %18 : vector<1x128xi32>
    %20 = arith.andi %17, %19 : vector<1x128xi1>
    %cst_7 = arith.constant 1.000000e+00 : f32
    %cst_8 = arith.constant 5.000000e-01 : f32
    %21 = vector.broadcast %cst_7 : f32 to vector<1x128xf32>
    %22 = vector.broadcast %cst_8 : f32 to vector<1x128xf32>
    %23 = arith.select %20, %21, %22 : vector<1x128xi1>, vector<1x128xf32>
    %cst_9 = arith.constant 0.000000e+00 : f32
    %cst_10 = arith.constant 5.000000e-01 : f32
    %24 = vector.broadcast %cst_9 : f32 to vector<1x128xf32>
    %25 = vector.broadcast %cst_10 : f32 to vector<1x128xf32>
    %26 = arith.select %20, %24, %25 : vector<1x128xi1>, vector<1x128xf32>
    %cst_11 = arith.constant 0.000000e+00 : f32
    %27 = vector.broadcast %cst_11 : f32 to vector<8x32xf32>
    %cst_12 = arith.constant 0.000000e+00 : f32
    %28 = vector.broadcast %cst_12 : f32 to vector<8x32xf32>
    %29 = vector.extract_strided_slice %13 {offsets = [0, 0], sizes = [8, 128], strides = [1, 1]} : vector<64x128xf32> to vector<8x128xf32>
    %30 = arith.truncf %27 : vector<8x32xf32> to vector<8x32xbf16>
    %cst_13 = arith.constant dense<0.000000e+00> : vector<8x128xf32>
    %31 = tpu.matmul %30, %14, %cst_13 {dimension_numbers = #tpu.dot_dimension_numbers<[1], [0], [0], [1], [0, 0, 1, 1], [], []>} : vector<8x32xbf16>, vector<32x128xbf16>, vector<8x128xf32> -> vector<8x128xf32>
    %32 = arith.addf %29, %31 : vector<8x128xf32>
    %33 = vector.broadcast %23 : vector<1x128xf32> to vector<8x128xf32>
    %34 = arith.mulf %32, %33 : vector<8x128xf32>
    %35 = math.tanh %34 : vector<8x128xf32>
    %36 = vector.broadcast %23 : vector<1x128xf32> to vector<8x128xf32>
    %37 = arith.mulf %35, %36 : vector<8x128xf32>
    %38 = vector.broadcast %26 : vector<1x128xf32> to vector<8x128xf32>
    %39 = arith.addf %37, %38 : vector<8x128xf32>
    %40 = vector.extract_strided_slice %39 {offsets = [0, 0], sizes = [8, 32], strides = [1, 1]} : vector<8x128xf32> to vector<8x32xf32>
    %41 = vector.extract_strided_slice %39 {offsets = [0, 32], sizes = [8, 32], strides = [1, 1]} : vector<8x128xf32> to vector<8x32xf32>
    %42 = vector.extract_strided_slice %39 {offsets = [0, 64], sizes = [8, 32], strides = [1, 1]} : vector<8x128xf32> to vector<8x32xf32>
    %43 = vector.extract_strided_slice %39 {offsets = [0, 96], sizes = [8, 32], strides = [1, 1]} : vector<8x128xf32> to vector<8x32xf32>
    %44 = arith.mulf %41, %28 : vector<8x32xf32>
    %45 = arith.mulf %40, %42 : vector<8x32xf32>
    %46 = arith.addf %44, %45 : vector<8x32xf32>
    %47 = math.tanh %46 : vector<8x32xf32>
    %48 = arith.mulf %43, %47 : vector<8x32xf32>
    %49 = vector.extract_strided_slice %13 {offsets = [8, 0], sizes = [8, 128], strides = [1, 1]} : vector<64x128xf32> to vector<8x128xf32>
    %50 = arith.truncf %48 : vector<8x32xf32> to vector<8x32xbf16>
    %cst_14 = arith.constant dense<0.000000e+00> : vector<8x128xf32>
    %51 = tpu.matmul %50, %14, %cst_14 {dimension_numbers = #tpu.dot_dimension_numbers<[1], [0], [0], [1], [0, 0, 1, 1], [], []>} : vector<8x32xbf16>, vector<32x128xbf16>, vector<8x128xf32> -> vector<8x128xf32>
    %52 = arith.addf %49, %51 : vector<8x128xf32>
    %53 = vector.broadcast %23 : vector<1x128xf32> to vector<8x128xf32>
    %54 = arith.mulf %52, %53 : vector<8x128xf32>
    %55 = math.tanh %54 : vector<8x128xf32>
    %56 = vector.broadcast %23 : vector<1x128xf32> to vector<8x128xf32>
    %57 = arith.mulf %55, %56 : vector<8x128xf32>
    %58 = vector.broadcast %26 : vector<1x128xf32> to vector<8x128xf32>
    %59 = arith.addf %57, %58 : vector<8x128xf32>
    %60 = vector.extract_strided_slice %59 {offsets = [0, 0], sizes = [8, 32], strides = [1, 1]} : vector<8x128xf32> to vector<8x32xf32>
    %61 = vector.extract_strided_slice %59 {offsets = [0, 32], sizes = [8, 32], strides = [1, 1]} : vector<8x128xf32> to vector<8x32xf32>
    %62 = vector.extract_strided_slice %59 {offsets = [0, 64], sizes = [8, 32], strides = [1, 1]} : vector<8x128xf32> to vector<8x32xf32>
    %63 = vector.extract_strided_slice %59 {offsets = [0, 96], sizes = [8, 32], strides = [1, 1]} : vector<8x128xf32> to vector<8x32xf32>
    %64 = arith.mulf %61, %46 : vector<8x32xf32>
    %65 = arith.mulf %60, %62 : vector<8x32xf32>
    %66 = arith.addf %64, %65 : vector<8x32xf32>
    %67 = math.tanh %66 : vector<8x32xf32>
    %68 = arith.mulf %63, %67 : vector<8x32xf32>
    %69 = vector.extract_strided_slice %13 {offsets = [16, 0], sizes = [8, 128], strides = [1, 1]} : vector<64x128xf32> to vector<8x128xf32>
    %70 = arith.truncf %68 : vector<8x32xf32> to vector<8x32xbf16>
    %cst_15 = arith.constant dense<0.000000e+00> : vector<8x128xf32>
    %71 = tpu.matmul %70, %14, %cst_15 {dimension_numbers = #tpu.dot_dimension_numbers<[1], [0], [0], [1], [0, 0, 1, 1], [], []>} : vector<8x32xbf16>, vector<32x128xbf16>, vector<8x128xf32> -> vector<8x128xf32>
    %72 = arith.addf %69, %71 : vector<8x128xf32>
    %73 = vector.broadcast %23 : vector<1x128xf32> to vector<8x128xf32>
    %74 = arith.mulf %72, %73 : vector<8x128xf32>
    %75 = math.tanh %74 : vector<8x128xf32>
    %76 = vector.broadcast %23 : vector<1x128xf32> to vector<8x128xf32>
    %77 = arith.mulf %75, %76 : vector<8x128xf32>
    %78 = vector.broadcast %26 : vector<1x128xf32> to vector<8x128xf32>
    %79 = arith.addf %77, %78 : vector<8x128xf32>
    %80 = vector.extract_strided_slice %79 {offsets = [0, 0], sizes = [8, 32], strides = [1, 1]} : vector<8x128xf32> to vector<8x32xf32>
    %81 = vector.extract_strided_slice %79 {offsets = [0, 32], sizes = [8, 32], strides = [1, 1]} : vector<8x128xf32> to vector<8x32xf32>
    %82 = vector.extract_strided_slice %79 {offsets = [0, 64], sizes = [8, 32], strides = [1, 1]} : vector<8x128xf32> to vector<8x32xf32>
    %83 = vector.extract_strided_slice %79 {offsets = [0, 96], sizes = [8, 32], strides = [1, 1]} : vector<8x128xf32> to vector<8x32xf32>
    %84 = arith.mulf %81, %66 : vector<8x32xf32>
    %85 = arith.mulf %80, %82 : vector<8x32xf32>
    %86 = arith.addf %84, %85 : vector<8x32xf32>
    %87 = math.tanh %86 : vector<8x32xf32>
    %88 = arith.mulf %83, %87 : vector<8x32xf32>
    %89 = vector.extract_strided_slice %13 {offsets = [24, 0], sizes = [8, 128], strides = [1, 1]} : vector<64x128xf32> to vector<8x128xf32>
    %90 = arith.truncf %88 : vector<8x32xf32> to vector<8x32xbf16>
    %cst_16 = arith.constant dense<0.000000e+00> : vector<8x128xf32>
    %91 = tpu.matmul %90, %14, %cst_16 {dimension_numbers = #tpu.dot_dimension_numbers<[1], [0], [0], [1], [0, 0, 1, 1], [], []>} : vector<8x32xbf16>, vector<32x128xbf16>, vector<8x128xf32> -> vector<8x128xf32>
    %92 = arith.addf %89, %91 : vector<8x128xf32>
    %93 = vector.broadcast %23 : vector<1x128xf32> to vector<8x128xf32>
    %94 = arith.mulf %92, %93 : vector<8x128xf32>
    %95 = math.tanh %94 : vector<8x128xf32>
    %96 = vector.broadcast %23 : vector<1x128xf32> to vector<8x128xf32>
    %97 = arith.mulf %95, %96 : vector<8x128xf32>
    %98 = vector.broadcast %26 : vector<1x128xf32> to vector<8x128xf32>
    %99 = arith.addf %97, %98 : vector<8x128xf32>
    %100 = vector.extract_strided_slice %99 {offsets = [0, 0], sizes = [8, 32], strides = [1, 1]} : vector<8x128xf32> to vector<8x32xf32>
    %101 = vector.extract_strided_slice %99 {offsets = [0, 32], sizes = [8, 32], strides = [1, 1]} : vector<8x128xf32> to vector<8x32xf32>
    %102 = vector.extract_strided_slice %99 {offsets = [0, 64], sizes = [8, 32], strides = [1, 1]} : vector<8x128xf32> to vector<8x32xf32>
    %103 = vector.extract_strided_slice %99 {offsets = [0, 96], sizes = [8, 32], strides = [1, 1]} : vector<8x128xf32> to vector<8x32xf32>
    %104 = arith.mulf %101, %86 : vector<8x32xf32>
    %105 = arith.mulf %100, %102 : vector<8x32xf32>
    %106 = arith.addf %104, %105 : vector<8x32xf32>
    %107 = math.tanh %106 : vector<8x32xf32>
    %108 = arith.mulf %103, %107 : vector<8x32xf32>
    %109 = vector.extract_strided_slice %13 {offsets = [32, 0], sizes = [8, 128], strides = [1, 1]} : vector<64x128xf32> to vector<8x128xf32>
    %110 = arith.truncf %108 : vector<8x32xf32> to vector<8x32xbf16>
    %cst_17 = arith.constant dense<0.000000e+00> : vector<8x128xf32>
    %111 = tpu.matmul %110, %14, %cst_17 {dimension_numbers = #tpu.dot_dimension_numbers<[1], [0], [0], [1], [0, 0, 1, 1], [], []>} : vector<8x32xbf16>, vector<32x128xbf16>, vector<8x128xf32> -> vector<8x128xf32>
    %112 = arith.addf %109, %111 : vector<8x128xf32>
    %113 = vector.broadcast %23 : vector<1x128xf32> to vector<8x128xf32>
    %114 = arith.mulf %112, %113 : vector<8x128xf32>
    %115 = math.tanh %114 : vector<8x128xf32>
    %116 = vector.broadcast %23 : vector<1x128xf32> to vector<8x128xf32>
    %117 = arith.mulf %115, %116 : vector<8x128xf32>
    %118 = vector.broadcast %26 : vector<1x128xf32> to vector<8x128xf32>
    %119 = arith.addf %117, %118 : vector<8x128xf32>
    %120 = vector.extract_strided_slice %119 {offsets = [0, 0], sizes = [8, 32], strides = [1, 1]} : vector<8x128xf32> to vector<8x32xf32>
    %121 = vector.extract_strided_slice %119 {offsets = [0, 32], sizes = [8, 32], strides = [1, 1]} : vector<8x128xf32> to vector<8x32xf32>
    %122 = vector.extract_strided_slice %119 {offsets = [0, 64], sizes = [8, 32], strides = [1, 1]} : vector<8x128xf32> to vector<8x32xf32>
    %123 = vector.extract_strided_slice %119 {offsets = [0, 96], sizes = [8, 32], strides = [1, 1]} : vector<8x128xf32> to vector<8x32xf32>
    %124 = arith.mulf %121, %106 : vector<8x32xf32>
    %125 = arith.mulf %120, %122 : vector<8x32xf32>
    %126 = arith.addf %124, %125 : vector<8x32xf32>
    %127 = math.tanh %126 : vector<8x32xf32>
    %128 = arith.mulf %123, %127 : vector<8x32xf32>
    %129 = vector.extract_strided_slice %13 {offsets = [40, 0], sizes = [8, 128], strides = [1, 1]} : vector<64x128xf32> to vector<8x128xf32>
    %130 = arith.truncf %128 : vector<8x32xf32> to vector<8x32xbf16>
    %cst_18 = arith.constant dense<0.000000e+00> : vector<8x128xf32>
    %131 = tpu.matmul %130, %14, %cst_18 {dimension_numbers = #tpu.dot_dimension_numbers<[1], [0], [0], [1], [0, 0, 1, 1], [], []>} : vector<8x32xbf16>, vector<32x128xbf16>, vector<8x128xf32> -> vector<8x128xf32>
    %132 = arith.addf %129, %131 : vector<8x128xf32>
    %133 = vector.broadcast %23 : vector<1x128xf32> to vector<8x128xf32>
    %134 = arith.mulf %132, %133 : vector<8x128xf32>
    %135 = math.tanh %134 : vector<8x128xf32>
    %136 = vector.broadcast %23 : vector<1x128xf32> to vector<8x128xf32>
    %137 = arith.mulf %135, %136 : vector<8x128xf32>
    %138 = vector.broadcast %26 : vector<1x128xf32> to vector<8x128xf32>
    %139 = arith.addf %137, %138 : vector<8x128xf32>
    %140 = vector.extract_strided_slice %139 {offsets = [0, 0], sizes = [8, 32], strides = [1, 1]} : vector<8x128xf32> to vector<8x32xf32>
    %141 = vector.extract_strided_slice %139 {offsets = [0, 32], sizes = [8, 32], strides = [1, 1]} : vector<8x128xf32> to vector<8x32xf32>
    %142 = vector.extract_strided_slice %139 {offsets = [0, 64], sizes = [8, 32], strides = [1, 1]} : vector<8x128xf32> to vector<8x32xf32>
    %143 = vector.extract_strided_slice %139 {offsets = [0, 96], sizes = [8, 32], strides = [1, 1]} : vector<8x128xf32> to vector<8x32xf32>
    %144 = arith.mulf %141, %126 : vector<8x32xf32>
    %145 = arith.mulf %140, %142 : vector<8x32xf32>
    %146 = arith.addf %144, %145 : vector<8x32xf32>
    %147 = math.tanh %146 : vector<8x32xf32>
    %148 = arith.mulf %143, %147 : vector<8x32xf32>
    %149 = vector.extract_strided_slice %13 {offsets = [48, 0], sizes = [8, 128], strides = [1, 1]} : vector<64x128xf32> to vector<8x128xf32>
    %150 = arith.truncf %148 : vector<8x32xf32> to vector<8x32xbf16>
    %cst_19 = arith.constant dense<0.000000e+00> : vector<8x128xf32>
    %151 = tpu.matmul %150, %14, %cst_19 {dimension_numbers = #tpu.dot_dimension_numbers<[1], [0], [0], [1], [0, 0, 1, 1], [], []>} : vector<8x32xbf16>, vector<32x128xbf16>, vector<8x128xf32> -> vector<8x128xf32>
    %152 = arith.addf %149, %151 : vector<8x128xf32>
    %153 = vector.broadcast %23 : vector<1x128xf32> to vector<8x128xf32>
    %154 = arith.mulf %152, %153 : vector<8x128xf32>
    %155 = math.tanh %154 : vector<8x128xf32>
    %156 = vector.broadcast %23 : vector<1x128xf32> to vector<8x128xf32>
    %157 = arith.mulf %155, %156 : vector<8x128xf32>
    %158 = vector.broadcast %26 : vector<1x128xf32> to vector<8x128xf32>
    %159 = arith.addf %157, %158 : vector<8x128xf32>
    %160 = vector.extract_strided_slice %159 {offsets = [0, 0], sizes = [8, 32], strides = [1, 1]} : vector<8x128xf32> to vector<8x32xf32>
    %161 = vector.extract_strided_slice %159 {offsets = [0, 32], sizes = [8, 32], strides = [1, 1]} : vector<8x128xf32> to vector<8x32xf32>
    %162 = vector.extract_strided_slice %159 {offsets = [0, 64], sizes = [8, 32], strides = [1, 1]} : vector<8x128xf32> to vector<8x32xf32>
    %163 = vector.extract_strided_slice %159 {offsets = [0, 96], sizes = [8, 32], strides = [1, 1]} : vector<8x128xf32> to vector<8x32xf32>
    %164 = arith.mulf %161, %146 : vector<8x32xf32>
    %165 = arith.mulf %160, %162 : vector<8x32xf32>
    %166 = arith.addf %164, %165 : vector<8x32xf32>
    %167 = math.tanh %166 : vector<8x32xf32>
    %168 = arith.mulf %163, %167 : vector<8x32xf32>
    %169 = vector.extract_strided_slice %13 {offsets = [56, 0], sizes = [8, 128], strides = [1, 1]} : vector<64x128xf32> to vector<8x128xf32>
    %170 = arith.truncf %168 : vector<8x32xf32> to vector<8x32xbf16>
    %cst_20 = arith.constant dense<0.000000e+00> : vector<8x128xf32>
    %171 = tpu.matmul %170, %14, %cst_20 {dimension_numbers = #tpu.dot_dimension_numbers<[1], [0], [0], [1], [0, 0, 1, 1], [], []>} : vector<8x32xbf16>, vector<32x128xbf16>, vector<8x128xf32> -> vector<8x128xf32>
    %172 = arith.addf %169, %171 : vector<8x128xf32>
    %173 = vector.broadcast %23 : vector<1x128xf32> to vector<8x128xf32>
    %174 = arith.mulf %172, %173 : vector<8x128xf32>
    %175 = math.tanh %174 : vector<8x128xf32>
    %176 = vector.broadcast %23 : vector<1x128xf32> to vector<8x128xf32>
    %177 = arith.mulf %175, %176 : vector<8x128xf32>
    %178 = vector.broadcast %26 : vector<1x128xf32> to vector<8x128xf32>
    %179 = arith.addf %177, %178 : vector<8x128xf32>
    %180 = vector.extract_strided_slice %179 {offsets = [0, 0], sizes = [8, 32], strides = [1, 1]} : vector<8x128xf32> to vector<8x32xf32>
    %181 = vector.extract_strided_slice %179 {offsets = [0, 32], sizes = [8, 32], strides = [1, 1]} : vector<8x128xf32> to vector<8x32xf32>
    %182 = vector.extract_strided_slice %179 {offsets = [0, 64], sizes = [8, 32], strides = [1, 1]} : vector<8x128xf32> to vector<8x32xf32>
    %183 = vector.extract_strided_slice %179 {offsets = [0, 96], sizes = [8, 32], strides = [1, 1]} : vector<8x128xf32> to vector<8x32xf32>
    %184 = arith.mulf %181, %166 : vector<8x32xf32>
    %185 = arith.mulf %180, %182 : vector<8x32xf32>
    %186 = arith.addf %184, %185 : vector<8x32xf32>
    %187 = math.tanh %186 : vector<8x32xf32>
    %188 = arith.mulf %183, %187 : vector<8x32xf32>
    %189 = tpu.concatenate %48, %68, %88, %108, %128, %148, %168, %188 in 0 : vector<8x32xf32>, vector<8x32xf32>, vector<8x32xf32>, vector<8x32xf32>, vector<8x32xf32>, vector<8x32xf32>, vector<8x32xf32>, vector<8x32xf32> -> vector<64x32xf32>
    %190 = arith.truncf %189 : vector<64x32xf32> to vector<64x32xbf16>
    %c0_21 = arith.constant 0 : index
    %c0_22 = arith.constant 0 : index
    %191 = vector.load %arg5[%c0_21, %c0_22] : memref<32x128xbf16, #tpu.memory_space<vmem>>, vector<32x128xbf16>
    %cst_23 = arith.constant dense<0.000000e+00> : vector<64x128xf32>
    %192 = tpu.matmul %190, %191, %cst_23 {dimension_numbers = #tpu.dot_dimension_numbers<[1], [0], [0], [1], [0, 0, 1, 1], [], []>} : vector<64x32xbf16>, vector<32x128xbf16>, vector<64x128xf32> -> vector<64x128xf32>
    %c0_24 = arith.constant 0 : index
    %c0_25 = arith.constant 0 : index
    %193 = vector.load %arg6[%c0_24, %c0_25] : memref<1x128xf32, #tpu.memory_space<vmem>>, vector<1x128xf32>
    %194 = vector.broadcast %193 : vector<1x128xf32> to vector<64x128xf32>
    %195 = arith.addf %192, %194 : vector<64x128xf32>
    %cst_26 = arith.constant dense<0xFF800000> : vector<64xf32>
    %196 = vector.multi_reduction <maximumf>, %195, %cst_26 [1] : vector<64x128xf32> to vector<64xf32>
    %197 = vector.shape_cast %196 : vector<64xf32> to vector<64x1xf32>
    %198 = vector.broadcast %197 : vector<64x1xf32> to vector<64x128xf32>
    %199 = arith.subf %195, %198 : vector<64x128xf32>
    %200 = math.exp %199 : vector<64x128xf32>
    %cst_27 = arith.constant dense<0.000000e+00> : vector<64xf32>
    %201 = vector.multi_reduction <add>, %200, %cst_27 [1] : vector<64x128xf32> to vector<64xf32>
    %202 = vector.shape_cast %201 : vector<64xf32> to vector<64x1xf32>
    %203 = math.log %202 : vector<64x1xf32>
    %cst_28 = arith.constant dense<0.000000e+00> : vector<64xf32>
    %204 = vector.multi_reduction <add>, %199, %cst_28 [1] : vector<64x128xf32> to vector<64xf32>
    %205 = vector.shape_cast %204 : vector<64xf32> to vector<64x1xf32>
    %c-1_i32 = arith.constant -1 : i32
    %206 = vector.broadcast %c-1_i32 : i32 to vector<64x1xi32>
    %207 = arith.cmpi ne, %2, %206 : vector<64x1xi32>
    %208 = arith.extui %207 : vector<64x1xi1> to vector<64x1xi32>
    %209 = arith.sitofp %208 : vector<64x1xi32> to vector<64x1xf32>
    %c-1_i32_29 = arith.constant -1 : i32
    %210 = vector.broadcast %c-1_i32_29 : i32 to vector<64x1xi32>
    %211 = arith.cmpi eq, %2, %210 : vector<64x1xi32>
    %c0_i32 = arith.constant 0 : i32
    %212 = vector.broadcast %c0_i32 : i32 to vector<64x1xi32>
    %213 = arith.select %211, %212, %2 : vector<64x1xi1>, vector<64x1xi32>
    %214 = vector.broadcast %213 : vector<64x1xi32> to vector<64x128xi32>
    %215 = arith.cmpi eq, %3, %214 : vector<64x128xi32>
    %216 = arith.extui %215 : vector<64x128xi1> to vector<64x128xi32>
    %217 = arith.sitofp %216 : vector<64x128xi32> to vector<64x128xf32>
    %218 = arith.mulf %217, %199 : vector<64x128xf32>
    %cst_30 = arith.constant dense<0.000000e+00> : vector<64xf32>
    %219 = vector.multi_reduction <add>, %218, %cst_30 [1] : vector<64x128xf32> to vector<64xf32>
    %220 = vector.shape_cast %219 : vector<64xf32> to vector<64x1xf32>
    %221 = arith.subf %220, %203 : vector<64x1xf32>
    %cst_31 = arith.constant 1.280000e+02 : f32
    %222 = vector.broadcast %cst_31 : f32 to vector<64x1xf32>
    %223 = arith.mulf %222, %203 : vector<64x1xf32>
    %224 = arith.subf %205, %223 : vector<64x1xf32>
    %cst_32 = arith.constant 0.899212599 : f32
    %225 = vector.broadcast %cst_32 : f32 to vector<64x1xf32>
    %226 = arith.mulf %225, %221 : vector<64x1xf32>
    %cst_33 = arith.constant -0.809501707 : f32
    %227 = vector.broadcast %cst_33 : f32 to vector<64x1xf32>
    %228 = arith.subf %227, %226 : vector<64x1xf32>
    %cst_34 = arith.constant 7.87401571E-4 : f32
    %229 = vector.broadcast %cst_34 : f32 to vector<64x1xf32>
    %230 = arith.mulf %229, %224 : vector<64x1xf32>
    %231 = arith.subf %228, %230 : vector<64x1xf32>
    %232 = arith.mulf %231, %209 : vector<64x1xf32>
    %233 = tpu.iota {dimensions = array<i32: 0>} : vector<64x128xi32>
    %234 = tpu.iota {dimensions = array<i32: 1>} : vector<64x128xi32>
    %c7_i32 = arith.constant 7 : i32
    %235 = vector.broadcast %c7_i32 : i32 to vector<64x128xi32>
    %236 = arith.andi %233, %235 : vector<64x128xi32>
    %237 = arith.cmpi eq, %236, %234 : vector<64x128xi32>
    %238 = arith.extui %237 : vector<64x128xi1> to vector<64x128xi32>
    %239 = arith.sitofp %238 : vector<64x128xi32> to vector<64x128xf32>
    %240 = vector.broadcast %232 : vector<64x1xf32> to vector<64x128xf32>
    %241 = arith.mulf %240, %239 : vector<64x128xf32>
    %cst_35 = arith.constant dense<0.000000e+00> : vector<128xf32>
    %242 = vector.multi_reduction <add>, %241, %cst_35 [0] : vector<64x128xf32> to vector<128xf32>
    %243 = vector.shape_cast %242 : vector<128xf32> to vector<1x128xf32>
    %244 = vector.broadcast %209 : vector<64x1xf32> to vector<64x128xf32>
    %245 = arith.mulf %244, %239 : vector<64x128xf32>
    %cst_36 = arith.constant dense<0.000000e+00> : vector<128xf32>
    %246 = vector.multi_reduction <add>, %245, %cst_36 [0] : vector<64x128xf32> to vector<128xf32>
    %247 = vector.shape_cast %246 : vector<128xf32> to vector<1x128xf32>
    %cst_37 = arith.constant dense<0.000000e+00> : vector<1xf32>
    %248 = vector.multi_reduction <add>, %243, %cst_37 [1] : vector<1x128xf32> to vector<1xf32>
    %249 = vector.shape_cast %248 : vector<1xf32> to vector<1x1xf32>
    %c0_38 = arith.constant 0 : index
    %250 = memref.load %arg1[%c0_38] : memref<1xf32, #tpu.memory_space<smem>>
    %cst_39 = arith.constant 2.500000e-01 : f32
    %251 = vector.broadcast %cst_39 : f32 to vector<1x1xf32>
    %252 = arith.mulf %249, %251 : vector<1x1xf32>
    %cst_40 = arith.constant 4.000000e+00 : f32
    %253 = vector.broadcast %cst_40 : f32 to vector<1x1xf32>
    %254 = arith.mulf %252, %253 : vector<1x1xf32>
    %255 = vector.broadcast %250 : f32 to vector<1x1xf32>
    %256 = arith.divf %254, %255 : vector<1x1xf32>
    %257 = math.exp %256 : vector<1x1xf32>
    %cst_41 = arith.constant 1.000000e+00 : f32
    %258 = vector.broadcast %cst_41 : f32 to vector<1x128xf32>
    %259 = arith.maximumf %247, %258 : vector<1x128xf32>
    %260 = arith.divf %243, %259 : vector<1x128xf32>
    %261 = math.exp %260 : vector<1x128xf32>
    %c0_42 = arith.constant 0 : index
    %c0_43 = arith.constant 0 : index
    %262 = vector.load %arg8[%c0_42, %c0_43] : memref<1x128xf32, #tpu.memory_space<vmem>>, vector<1x128xf32>
    tpu.vector_store %arg8[%c0_42, %c0_43], %261 {strides = array<i32>} : memref<1x128xf32, #tpu.memory_space<vmem>>, vector<1x128xf32>,
    %263 = tpu.iota {dimensions = array<i32: 1>} : vector<1x128xi32>
    %c0_i32_44 = arith.constant 0 : i32
    %264 = vector.broadcast %c0_i32_44 : i32 to vector<1x128xi32>
    %265 = arith.cmpi eq, %263, %264 : vector<1x128xi32>
    %cst_45 = arith.constant 0.000000e+00 : f32
    %266 = vector.shape_cast %252 : vector<1x1xf32> to vector<1x1xf32>
    %267 = vector.broadcast %266 : vector<1x1xf32> to vector<1x128xf32>
    %268 = vector.broadcast %cst_45 : f32 to vector<1x128xf32>
    %269 = arith.select %265, %267, %268 : vector<1x128xi1>, vector<1x128xf32>
    %c1_i32 = arith.constant 1 : i32
    %270 = vector.broadcast %c1_i32 : i32 to vector<1x128xi32>
    %271 = arith.cmpi eq, %263, %270 : vector<1x128xi32>
    %cst_46 = arith.constant 0.000000e+00 : f32
    %272 = vector.shape_cast %257 : vector<1x1xf32> to vector<1x1xf32>
    %273 = vector.broadcast %272 : vector<1x1xf32> to vector<1x128xf32>
    %274 = vector.broadcast %cst_46 : f32 to vector<1x128xf32>
    %275 = arith.select %271, %273, %274 : vector<1x128xi1>, vector<1x128xf32>
    %276 = arith.addf %269, %275 : vector<1x128xf32>
    %c2_i32 = arith.constant 2 : i32
    %277 = vector.broadcast %c2_i32 : i32 to vector<1x128xi32>
    %278 = arith.cmpi eq, %263, %277 : vector<1x128xi32>
    %cst_47 = arith.constant 0.000000e+00 : f32
    %279 = vector.broadcast %250 : f32 to vector<1x128xf32>
    %280 = vector.broadcast %cst_47 : f32 to vector<1x128xf32>
    %281 = arith.select %278, %279, %280 : vector<1x128xi1>, vector<1x128xf32>
    %282 = arith.addf %276, %281 : vector<1x128xf32>
    %c0_48 = arith.constant 0 : index
    %c0_49 = arith.constant 0 : index
    %283 = vector.load %arg7[%c0_48, %c0_49] : memref<1x128xf32, #tpu.memory_space<vmem>>, vector<1x128xf32>
    tpu.vector_store %arg7[%c0_48, %c0_49], %282 {strides = array<i32>} : memref<1x128xf32, #tpu.memory_space<vmem>>, vector<1x128xf32>,
    return
  }
}

</mosaic_0001>

<llo_original>
// kernel: rnnlm_forward.1
$region0: #{rnnlm_forward.1}
  #allocation0 [shape = 'u32[]', space=smem, size = 0x4, offset = 0x4, fixed_abs, tag = 'smem constant byte address 0x4 - core index']
  #allocation1 [shape = 'u32[144,128]{1,0:T(1,128)}', space=vmem, size = 0x12000, scoped, tag = 'internal scratch']
  #allocation2 [shape = 'f32[1]{0:T(128)S(6)}', space=smem, size = 0x200, scoped, tag = 'scoped memory for rnnlm_forward.1']
  %s0 = inlined_call_operand.vmem [shape: s32[64,2], index: 0, kind: input, shape index: {}]
  %s1 = inlined_call_operand.<no memory space> [shape: f32[1], index: 1, kind: input, shape index: {}]
  %s2 = inlined_call_operand.vmem [shape: bf16[128,128], index: 2, kind: input, shape index: {}]
  %s3 = inlined_call_operand.vmem [shape: bf16[32,128], index: 3, kind: input, shape index: {}]
  %s4 = inlined_call_operand.vmem [shape: f32[1,128], index: 4, kind: input, shape index: {}]
  %s5 = inlined_call_operand.vmem [shape: bf16[32,128], index: 5, kind: input, shape index: {}]
  %s6 = inlined_call_operand.vmem [shape: f32[1,128], index: 6, kind: input, shape index: {}]
  %s7 = inlined_call_operand.vmem [shape: f32[1,128], index: 7, kind: output, shape index: {0}]
  %s8 = inlined_call_operand.vmem [shape: f32[1,128], index: 8, kind: output, shape index: {1}]
  %9 = xla_tuple %s7, %s8
  %s10 = sld [smem:[#allocation0]]
  $region46: #{rnnlm_forward.1} parent=0
    _
  %s12 = ssub.s32 1, %s10
  %s13 = scalar_select 0, %s12, %s10
  %14 = sst [smem:[#allocation2]] %s1
  // Predicated region
  $region2: #{rnnlm_forward.1} parent=0 // pred_check
    _
  $region3: #{rnnlm_forward.1} parent=0 // pred_check_branch
    %16 = sbr.rel (0) target = $region5
  $region4: #{rnnlm_forward.1} parent=0 // pred_region
    _
  $region5: #{rnnlm_forward.1} parent=0 // pred_fallthru
    _
  // Predicated region
  $region6: #{rnnlm_forward.1} parent=0 // pred_check
    _
  $region7: #{rnnlm_forward.1} parent=0 // pred_check_branch
    %18 = sbr.rel (0) target = $region9
  $region8: #{rnnlm_forward.1} parent=0 // pred_region
    _
  $region9: #{rnnlm_forward.1} parent=0 // pred_fallthru
    _
  // Predicated region
  $region10: #{rnnlm_forward.1} parent=0 // pred_check
    _
  $region11: #{rnnlm_forward.1} parent=0 // pred_check_branch
    %20 = sbr.rel (0) target = $region13
  $region12: #{rnnlm_forward.1} parent=0 // pred_region
    _
  $region13: #{rnnlm_forward.1} parent=0 // pred_fallthru
    _
  // Predicated region
  $region14: #{rnnlm_forward.1} parent=0 // pred_check
    _
  $region15: #{rnnlm_forward.1} parent=0 // pred_check_branch
    %22 = sbr.rel (0) target = $region17
  $region16: #{rnnlm_forward.1} parent=0 // pred_region
    _
  $region17: #{rnnlm_forward.1} parent=0 // pred_fallthru
    _
  // Predicated region
  $region18: #{rnnlm_forward.1} parent=0 // pred_check
    _
  $region19: #{rnnlm_forward.1} parent=0 // pred_check_branch
    %24 = sbr.rel (0) target = $region21
  $region20: #{rnnlm_forward.1} parent=0 // pred_region
    _
  $region21: #{rnnlm_forward.1} parent=0 // pred_fallthru
    _
  // Predicated region
  $region22: #{rnnlm_forward.1} parent=0 // pred_check
    _
  $region23: #{rnnlm_forward.1} parent=0 // pred_check_branch
    %26 = sbr.rel (0) target = $region25
  $region24: #{rnnlm_forward.1} parent=0 // pred_region
    _
  $region25: #{rnnlm_forward.1} parent=0 // pred_fallthru
    _
  // Predicated region
  $region26: #{rnnlm_forward.1} parent=0 // pred_check
    _
  $region27: #{rnnlm_forward.1} parent=0 // pred_check_branch
    %28 = sbr.rel (0) target = $region29
  $region28: #{rnnlm_forward.1} parent=0 // pred_region
    _
  $region29: #{rnnlm_forward.1} parent=0 // pred_fallthru
    _
  %v30 = vld [vmem:[%s0] sm:$0xff]
  %v31 = vld [vmem:[%s0 + $0x8] sm:$0xff]
  %v32 = vld [vmem:[%s0 + $0x10] sm:$0xff]
  %v33 = vld [vmem:[%s0 + $0x18] sm:$0xff]
  %v34 = vld [vmem:[%s0 + $0x20] sm:$0xff]
  %v35 = vld [vmem:[%s0 + $0x28] sm:$0xff]
  %v36 = vld [vmem:[%s0 + $0x30] sm:$0xff]
  %v37 = vld [vmem:[%s0 + $0x38] sm:$0xff]
  %v38 = vlaneseq
  %v39 = vand.u32 %v38, 127
  %40 = vset.pattern.permute.xlu0 0
  %41 = vperm.xlu0 %40, %v30
  %v42 = vpop.permute.xlu0 %41
  %43 = vset.pattern.permute.xlu0 0
  %44 = vperm.xlu0 %43, %v31
  %v45 = vpop.permute.xlu0 %44
  %46 = vset.pattern.permute.xlu0 0
  %47 = vperm.xlu0 %46, %v32
  %v48 = vpop.permute.xlu0 %47
  %49 = vset.pattern.permute.xlu0 0
  %50 = vperm.xlu0 %49, %v33
  %v51 = vpop.permute.xlu0 %50
  %52 = vset.pattern.permute.xlu0 0
  %53 = vperm.xlu0 %52, %v34
  %v54 = vpop.permute.xlu0 %53
  %55 = vset.pattern.permute.xlu0 0
  %56 = vperm.xlu0 %55, %v35
  %v57 = vpop.permute.xlu0 %56
  %58 = vset.pattern.permute.xlu0 0
  %59 = vperm.xlu0 %58, %v36
  %v60 = vpop.permute.xlu0 %59
  %61 = vset.pattern.permute.xlu0 0
  %62 = vperm.xlu0 %61, %v37
  %v63 = vpop.permute.xlu0 %62
  %vm64 = vcmp.eq.s32.totalorder %v39, %v42
  %vm65 = vcmp.eq.s32.totalorder %v39, %v45
  %vm66 = vcmp.eq.s32.totalorder %v39, %v48
  %vm67 = vcmp.eq.s32.totalorder %v39, %v51
  %vm68 = vcmp.eq.s32.totalorder %v39, %v54
  %vm69 = vcmp.eq.s32.totalorder %v39, %v57
  %vm70 = vcmp.eq.s32.totalorder %v39, %v60
  %vm71 = vcmp.eq.s32.totalorder %v39, %v63
  %v72 = vsel %vm64, 1, 0
  %v73 = vsel %vm65, 1, 0
  %v74 = vsel %vm66, 1, 0
  %v75 = vsel %vm67, 1, 0
  %v76 = vsel %vm68, 1, 0
  %v77 = vsel %vm69, 1, 0
  %v78 = vsel %vm70, 1, 0
  %v79 = vsel %vm71, 1, 0
  %v80 = vcvt.s32.f32 %v72
  %v81 = vcvt.s32.f32 %v73
  %v82 = vcvt.s32.f32 %v74
  %v83 = vcvt.s32.f32 %v75
  %v84 = vcvt.s32.f32 %v76
  %v85 = vcvt.s32.f32 %v77
  %v86 = vcvt.s32.f32 %v78
  %v87 = vcvt.s32.f32 %v79
  %v88 = vpack.c.bf16 %v81, %v80
  %v89 = vpack.c.bf16 %v83, %v82
  %v90 = vpack.c.bf16 %v85, %v84
  %v91 = vpack.c.bf16 %v87, %v86
  %v92 = vld [vmem:[%s2] sm:$0xf]
  %v93 = vld [vmem:[%s2 + $0x4] sm:$0xf]
  %v94 = vld [vmem:[%s2 + $0x8] sm:$0xf]
  %v95 = vld [vmem:[%s2 + $0xc] sm:$0xf]
  %v96 = vld [vmem:[%s2 + $0x10] sm:$0xf]
  %v97 = vld [vmem:[%s2 + $0x14] sm:$0xf]
  %v98 = vld [vmem:[%s2 + $0x18] sm:$0xf]
  %v99 = vld [vmem:[%s2 + $0x1c] sm:$0xf]
  %v100 = vld [vmem:[%s2 + $0x20] sm:$0xf]
  %v101 = vld [vmem:[%s2 + $0x24] sm:$0xf]
  %v102 = vld [vmem:[%s2 + $0x28] sm:$0xf]
  %v103 = vld [vmem:[%s2 + $0x2c] sm:$0xf]
  %v104 = vld [vmem:[%s2 + $0x30] sm:$0xf]
  %v105 = vld [vmem:[%s2 + $0x34] sm:$0xf]
  %v106 = vld [vmem:[%s2 + $0x38] sm:$0xf]
  %v107 = vld [vmem:[%s2 + $0x3c] sm:$0xf]
  %v108 = vld [vmem:[%s4] sm:$0x1]
  %v110 = vlaneseq
  %v111 = vshrl.u32 %v110, 7
  %v112 = vsub.s32 0, %v111
  %v113 = vrot.slane %v108, %v112
  %v131 = vunpack.c.l.b16 %v92
  %v132 = vunpack.c.l.b16 %v93
  %v133 = vunpack.c.l.b16 %v94
  %v134 = vunpack.c.l.b16 %v95
  %v135 = vunpack.c.l.b16 %v96
  %v136 = vunpack.c.l.b16 %v97
  %v137 = vunpack.c.l.b16 %v98
  %v138 = vunpack.c.l.b16 %v99
  %v139 = vunpack.c.l.b16 %v100
  %v140 = vunpack.c.l.b16 %v101
  %v141 = vunpack.c.l.b16 %v102
  %v142 = vunpack.c.l.b16 %v103
  %v143 = vunpack.c.l.b16 %v104
  %v144 = vunpack.c.l.b16 %v105
  %v145 = vunpack.c.l.b16 %v106
  %v146 = vunpack.c.l.b16 %v107
  %v147 = vpack.c.b16 %v132, %v131
  %v148 = vpack.c.b16 %v134, %v133
  %v149 = vpack.c.b16 %v136, %v135
  %v150 = vpack.c.b16 %v138, %v137
  %v151 = vpack.c.b16 %v140, %v139
  %v152 = vpack.c.b16 %v142, %v141
  %v153 = vpack.c.b16 %v144, %v143
  %v154 = vpack.c.b16 %v146, %v145
  %163 = vmatprep.subr.bf16.mxu0 0
  %164 = vmatpush1.bf16.msra.mxu0 %v147
  %165 = vmatprep.subr.bf16.mxu0 0
  %166 = vmatpush1.bf16.msra.mxu0 %v148
  %167 = vmatprep.subr.bf16.mxu0 0
  %168 = vmatpush1.bf16.msra.mxu0 %v149
  %169 = vmatprep.subr.bf16.mxu0 0
  %170 = vmatpush1.bf16.msra.mxu0 %v150
  %171 = vmatprep.subr.bf16.mxu0 0
  %172 = vmatpush1.bf16.msra.mxu0 %v151
  %173 = vmatprep.subr.bf16.mxu0 0
  %174 = vmatpush1.bf16.msra.mxu0 %v152
  %175 = vmatprep.subr.bf16.mxu0 0
  %176 = vmatpush1.bf16.msra.mxu0 %v153
  %177 = vmatprep.subr.bf16.mxu0 0
  %178 = vmatpush1.bf16.msra.mxu0 %v154
  %179 = vmatprep.subr.bf16.mxu0 0
  %180 = vmatpush1.bf16.msra.mxu0 0
  %181 = vmatprep.subr.bf16.mxu0 0
  %182 = vmatpush1.bf16.msra.mxu0 0
  %183 = vmatprep.subr.bf16.mxu0 0
  %184 = vmatpush1.bf16.msra.mxu0 0
  %185 = vmatprep.subr.bf16.mxu0 0
  %186 = vmatpush1.bf16.msra.mxu0 0
  %187 = vmatprep.subr.bf16.mxu0 0
  %188 = vmatpush1.bf16.msra.mxu0 0
  %189 = vmatprep.subr.bf16.mxu0 0
  %190 = vmatpush1.bf16.msra.mxu0 0
  %191 = vmatprep.subr.bf16.mxu0 0
  %192 = vmatpush1.bf16.msra.mxu0 0
  %193 = vmatprep.subr.bf16.mxu0 0
  %194 = vmatpush1.bf16.msra.mxu0 0
  %195 = vmatprep.mubr.bf16.mxu0 0
  %196 = vmatmul.mubr.bf16.gmra.mrb[0].mxu0 %v88
  %v197 = vpop.f32.mrb[0].mxu0
  %v198 = vadd.f32 %v113, %v197
  %v199 = vpop.f32.mrb[0].mxu0
  %v200 = vpop.f32.mrb[0].mxu0
  %v201 = vadd.f32 %v113, %v200
  %v202 = vpop.f32.mrb[0].mxu0
  %203 = vmatprep.mubr.bf16.mxu0 0
  %204 = vmatmul.mubr.bf16.gmra.mrb[0].mxu0 %v89
  %v205 = vpop.f32.mrb[0].mxu0
  %v206 = vadd.f32 %v113, %v205
  %v207 = vpop.f32.mrb[0].mxu0
  %v208 = vpop.f32.mrb[0].mxu0
  %v209 = vadd.f32 %v113, %v208
  %v210 = vpop.f32.mrb[0].mxu0
  %211 = vmatprep.mubr.bf16.mxu0 0
  %212 = vmatmul.mubr.bf16.gmra.mrb[0].mxu0 %v90
  %v213 = vpop.f32.mrb[0].mxu0
  %v214 = vadd.f32 %v113, %v213
  %v215 = vpop.f32.mrb[0].mxu0
  %v216 = vpop.f32.mrb[0].mxu0
  %v217 = vadd.f32 %v113, %v216
  %v218 = vpop.f32.mrb[0].mxu0
  %219 = vmatprep.mubr.bf16.mxu0 0
  %220 = vmatmul.mubr.bf16.gmra.mrb[0].mxu0 %v91
  %v221 = vpop.f32.mrb[0].mxu0
  %v222 = vadd.f32 %v113, %v221
  %v223 = vpop.f32.mrb[0].mxu0
  %v224 = vpop.f32.mrb[0].mxu0
  %v225 = vadd.f32 %v113, %v224
  %v226 = vpop.f32.mrb[0].mxu0
  %227 = vdwg.mxu0
  %v228 = vld [vmem:[%s3] sm:$0xf]
  %v229 = vld [vmem:[%s3 + $0x4] sm:$0xf]
  %v230 = vld [vmem:[%s3 + $0x8] sm:$0xf]
  %v231 = vld [vmem:[%s3 + $0xc] sm:$0xf]
  %vm232 = vcmp.ge.s32.totalorder %v39, 64
  %vm233 = vcmp.lt.s32.totalorder %v39, 96
  %vm234 = vmand %vm232, %vm233
  %v235 = vsel %vm234, 1.0, 0.5
  %v236 = vsel %vm234, 0.0, 0.5
  %v241 = vunpack.c.l.b16 %v228
  %v242 = vunpack.c.l.b16 %v229
  %v243 = vunpack.c.l.b16 %v230
  %v244 = vunpack.c.l.b16 %v231
  %v245 = vpack.c.b16 %v242, %v241
  %v246 = vpack.c.b16 %v244, %v243
  %vm249 = vcmask 261120
  %v251 = vsel %vm249, 0, 0
  %253 = vmatprep.subr.bf16.mxu0 0
  %254 = vmatpush1.bf16.msra.mxu0 %v245
  %255 = vmatprep.subr.bf16.mxu0 0
  %256 = vmatpush1.bf16.msra.mxu0 %v246
  %257 = vmatprep.subr.bf16.mxu0 0
  %258 = vmatpush1.bf16.msra.mxu0 0
  %259 = vmatprep.subr.bf16.mxu0 0
  %260 = vmatpush1.bf16.msra.mxu0 0
  %261 = vmatprep.subr.bf16.mxu0 0
  %262 = vmatpush1.bf16.msra.mxu0 0
  %263 = vmatprep.subr.bf16.mxu0 0
  %264 = vmatpush1.bf16.msra.mxu0 0
  %265 = vmatprep.subr.bf16.mxu0 0
  %266 = vmatpush1.bf16.msra.mxu0 0
  %267 = vmatprep.subr.bf16.mxu0 0
  %268 = vmatpush1.bf16.msra.mxu0 0
  %269 = vmatprep.subr.bf16.mxu0 0
  %270 = vmatpush1.bf16.msra.mxu0 0
  %271 = vmatprep.subr.bf16.mxu0 0
  %272 = vmatpush1.bf16.msra.mxu0 0
  %273 = vmatprep.subr.bf16.mxu0 0
  %274 = vmatpush1.bf16.msra.mxu0 0
  %275 = vmatprep.subr.bf16.mxu0 0
  %276 = vmatpush1.bf16.msra.mxu0 0
  %277 = vmatprep.subr.bf16.mxu0 0
  %278 = vmatpush1.bf16.msra.mxu0 0
  %279 = vmatprep.subr.bf16.mxu0 0
  %280 = vmatpush1.bf16.msra.mxu0 0
  %281 = vmatprep.subr.bf16.mxu0 0
  %282 = vmatpush1.bf16.msra.mxu0 0
  %283 = vmatprep.subr.bf16.mxu0 0
  %284 = vmatpush1.bf16.msra.mxu0 0
  %285 = vmatprep.mubr.bf16.mxu0 0
  %286 = vmatmul.mubr.bf16.gmra.mrb[0].mxu0 %v251
  %v287 = vpop.f32.mrb[0].mxu0
  %v288 = vadd.f32 0.0, %v287
  %v289 = vpop.f32.mrb[0].mxu0
  %v290 = vpop.f32.mrb[0].mxu0
  %v291 = vpop.f32.mrb[0].mxu0
  %292 = vdwg.mxu0
  %v293 = vadd.f32 %v198, %v288
  %v294 = vmul.f32 %v293, %v235
  %v295 = vtanh.pop %v294
  %v296 = vmul.f32 %v295, %v235
  %v297 = vadd.f32 %v296, %v236
  %v298 = vmul.f32 %v297, 0.0
  %300 = vrot.lane.b32.xlu0 %v297, 64
  %v301 = vpop.permute.xlu0 %300
  %v303 = vmul.f32 %v297, %v301
  %305 = vrot.lane.b32.xlu0 %v303, 32
  %v306 = vpop.permute.xlu0 %305
  %v308 = vadd.f32 %v298, %v306
  %v309 = vtanh.pop %v308
  %311 = vrot.lane.b32.xlu0 %v309, 64
  %v312 = vpop.permute.xlu0 %311
  %v314 = vmul.f32 %v297, %v312
  %v315 = vpack.c.bf16 %v314, %v314
  %317 = vrot.lane.b32.xlu0 %v315, 32
  %v318 = vpop.permute.xlu0 %317
  %v320 = vsel %vm249, %v318, 0
  %322 = vmatprep.subr.bf16.mxu0 0
  %323 = vmatpush1.bf16.msra.mxu0 %v245
  %324 = vmatprep.subr.bf16.mxu0 0
  %325 = vmatpush1.bf16.msra.mxu0 %v246
  %326 = vmatprep.subr.bf16.mxu0 0
  %327 = vmatpush1.bf16.msra.mxu0 0
  %328 = vmatprep.subr.bf16.mxu0 0
  %329 = vmatpush1.bf16.msra.mxu0 0
  %330 = vmatprep.subr.bf16.mxu0 0
  %331 = vmatpush1.bf16.msra.mxu0 0
  %332 = vmatprep.subr.bf16.mxu0 0
  %333 = vmatpush1.bf16.msra.mxu0 0
  %334 = vmatprep.subr.bf16.mxu0 0
  %335 = vmatpush1.bf16.msra.mxu0 0
  %336 = vmatprep.subr.bf16.mxu0 0
  %337 = vmatpush1.bf16.msra.mxu0 0
  %338 = vmatprep.subr.bf16.mxu0 0
  %339 = vmatpush1.bf16.msra.mxu0 0
  %340 = vmatprep.subr.bf16.mxu0 0
  %341 = vmatpush1.bf16.msra.mxu0 0
  %342 = vmatprep.subr.bf16.mxu0 0
  %343 = vmatpush1.bf16.msra.mxu0 0
  %344 = vmatprep.subr.bf16.mxu0 0
  %345 = vmatpush1.bf16.msra.mxu0 0
  %346 = vmatprep.subr.bf16.mxu0 0
  %347 = vmatpush1.bf16.msra.mxu0 0
  %348 = vmatprep.subr.bf16.mxu0 0
  %349 = vmatpush1.bf16.msra.mxu0 0
  %350 = vmatprep.subr.bf16.mxu0 0
  %351 = vmatpush1.bf16.msra.mxu0 0
  %352 = vmatprep.subr.bf16.mxu0 0
  %353 = vmatpush1.bf16.msra.mxu0 0
  %354 = vmatprep.mubr.bf16.mxu0 0
  %355 = vmatmul.mubr.bf16.gmra.mrb[0].mxu0 %v320
  %v356 = vpop.f32.mrb[0].mxu0
  %v357 = vadd.f32 0.0, %v356
  %v358 = vpop.f32.mrb[0].mxu0
  %v359 = vpop.f32.mrb[0].mxu0
  %v360 = vpop.f32.mrb[0].mxu0
  %361 = vdwg.mxu0
  %v362 = vadd.f32 %v201, %v357
  %v363 = vmul.f32 %v362, %v235
  %v364 = vtanh.pop %v363
  %v365 = vmul.f32 %v364, %v235
  %v366 = vadd.f32 %v365, %v236
  %v367 = vmul.f32 %v366, %v308
  %369 = vrot.lane.b32.xlu0 %v366, 64
  %v370 = vpop.permute.xlu0 %369
  %v372 = vmul.f32 %v366, %v370
  %374 = vrot.lane.b32.xlu0 %v372, 32
  %v375 = vpop.permute.xlu0 %374
  %v377 = vadd.f32 %v367, %v375
  %v378 = vtanh.pop %v377
  %380 = vrot.lane.b32.xlu0 %v378, 64
  %v381 = vpop.permute.xlu0 %380
  %v383 = vmul.f32 %v366, %v381
  %v384 = vpack.c.bf16 %v383, %v383
  %386 = vrot.lane.b32.xlu0 %v384, 32
  %v387 = vpop.permute.xlu0 %386
  %v389 = vsel %vm249, %v387, 0
  %391 = vmatprep.subr.bf16.mxu0 0
  %392 = vmatpush1.bf16.msra.mxu0 %v245
  %393 = vmatprep.subr.bf16.mxu0 0
  %394 = vmatpush1.bf16.msra.mxu0 %v246
  %395 = vmatprep.subr.bf16.mxu0 0
  %396 = vmatpush1.bf16.msra.mxu0 0
  %397 = vmatprep.subr.bf16.mxu0 0
  %398 = vmatpush1.bf16.msra.mxu0 0
  %399 = vmatprep.subr.bf16.mxu0 0
  %400 = vmatpush1.bf16.msra.mxu0 0
  %401 = vmatprep.subr.bf16.mxu0 0
  %402 = vmatpush1.bf16.msra.mxu0 0
  %403 = vmatprep.subr.bf16.mxu0 0
  %404 = vmatpush1.bf16.msra.mxu0 0
  %405 = vmatprep.subr.bf16.mxu0 0
  %406 = vmatpush1.bf16.msra.mxu0 0
  %407 = vmatprep.subr.bf16.mxu0 0
  %408 = vmatpush1.bf16.msra.mxu0 0
  %409 = vmatprep.subr.bf16.mxu0 0
  %410 = vmatpush1.bf16.msra.mxu0 0
  %411 = vmatprep.subr.bf16.mxu0 0
  %412 = vmatpush1.bf16.msra.mxu0 0
  %413 = vmatprep.subr.bf16.mxu0 0
  %414 = vmatpush1.bf16.msra.mxu0 0
  %415 = vmatprep.subr.bf16.mxu0 0
  %416 = vmatpush1.bf16.msra.mxu0 0
  %417 = vmatprep.subr.bf16.mxu0 0
  %418 = vmatpush1.bf16.msra.mxu0 0
  %419 = vmatprep.subr.bf16.mxu0 0
  %420 = vmatpush1.bf16.msra.mxu0 0
  %421 = vmatprep.subr.bf16.mxu0 0
  %422 = vmatpush1.bf16.msra.mxu0 0
  %423 = vmatprep.mubr.bf16.mxu0 0
  %424 = vmatmul.mubr.bf16.gmra.mrb[0].mxu0 %v389
  %v425 = vpop.f32.mrb[0].mxu0
  %v426 = vadd.f32 0.0, %v425
  %v427 = vpop.f32.mrb[0].mxu0
  %v428 = vpop.f32.mrb[0].mxu0
  %v429 = vpop.f32.mrb[0].mxu0
  %430 = vdwg.mxu0
  %v431 = vadd.f32 %v206, %v426
  %v432 = vmul.f32 %v431, %v235
  %v433 = vtanh.pop %v432
  %v434 = vmul.f32 %v433, %v235
  %v435 = vadd.f32 %v434, %v236
  %v436 = vmul.f32 %v435, %v377
  %438 = vrot.lane.b32.xlu0 %v435, 64
  %v439 = vpop.permute.xlu0 %438
  %v441 = vmul.f32 %v435, %v439
  %443 = vrot.lane.b32.xlu0 %v441, 32
  %v444 = vpop.permute.xlu0 %443
  %v446 = vadd.f32 %v436, %v444
  %v447 = vtanh.pop %v446
  %449 = vrot.lane.b32.xlu0 %v447, 64
  %v450 = vpop.permute.xlu0 %449
  %v452 = vmul.f32 %v435, %v450
  %v453 = vpack.c.bf16 %v452, %v452
  %455 = vrot.lane.b32.xlu0 %v453, 32
  %v456 = vpop.permute.xlu0 %455
  %v458 = vsel %vm249, %v456, 0
  %460 = vmatprep.subr.bf16.mxu0 0
  %461 = vmatpush1.bf16.msra.mxu0 %v245
  %462 = vmatprep.subr.bf16.mxu0 0
  %463 = vmatpush1.bf16.msra.mxu0 %v246
  %464 = vmatprep.subr.bf16.mxu0 0
  %465 = vmatpush1.bf16.msra.mxu0 0
  %466 = vmatprep.subr.bf16.mxu0 0
  %467 = vmatpush1.bf16.msra.mxu0 0
  %468 = vmatprep.subr.bf16.mxu0 0
  %469 = vmatpush1.bf16.msra.mxu0 0
  %470 = vmatprep.subr.bf16.mxu0 0
  %471 = vmatpush1.bf16.msra.mxu0 0
  %472 = vmatprep.subr.bf16.mxu0 0
  %473 = vmatpush1.bf16.msra.mxu0 0
  %474 = vmatprep.subr.bf16.mxu0 0
  %475 = vmatpush1.bf16.msra.mxu0 0
  %476 = vmatprep.subr.bf16.mxu0 0
  %477 = vmatpush1.bf16.msra.mxu0 0
  %478 = vmatprep.subr.bf16.mxu0 0
  %479 = vmatpush1.bf16.msra.mxu0 0
  %480 = vmatprep.subr.bf16.mxu0 0
  %481 = vmatpush1.bf16.msra.mxu0 0
  %482 = vmatprep.subr.bf16.mxu0 0
  %483 = vmatpush1.bf16.msra.mxu0 0
  %484 = vmatprep.subr.bf16.mxu0 0
  %485 = vmatpush1.bf16.msra.mxu0 0
  %486 = vmatprep.subr.bf16.mxu0 0
  %487 = vmatpush1.bf16.msra.mxu0 0
  %488 = vmatprep.subr.bf16.mxu0 0
  %489 = vmatpush1.bf16.msra.mxu0 0
  %490 = vmatprep.subr.bf16.mxu0 0
  %491 = vmatpush1.bf16.msra.mxu0 0
  %492 = vmatprep.mubr.bf16.mxu0 0
  %493 = vmatmul.mubr.bf16.gmra.mrb[0].mxu0 %v458
  %v494 = vpop.f32.mrb[0].mxu0
  %v495 = vadd.f32 0.0, %v494
  %v496 = vpop.f32.mrb[0].mxu0
  %v497 = vpop.f32.mrb[0].mxu0
  %v498 = vpop.f32.mrb[0].mxu0
  %499 = vdwg.mxu0
  %v500 = vadd.f32 %v209, %v495
  %v501 = vmul.f32 %v500, %v235
  %v502 = vtanh.pop %v501
  %v503 = vmul.f32 %v502, %v235
  %v504 = vadd.f32 %v503, %v236
  %v505 = vmul.f32 %v504, %v446
  %507 = vrot.lane.b32.xlu0 %v504, 64
  %v508 = vpop.permute.xlu0 %507
  %v510 = vmul.f32 %v504, %v508
  %512 = vrot.lane.b32.xlu0 %v510, 32
  %v513 = vpop.permute.xlu0 %512
  %v515 = vadd.f32 %v505, %v513
  %v516 = vtanh.pop %v515
  %518 = vrot.lane.b32.xlu0 %v516, 64
  %v519 = vpop.permute.xlu0 %518
  %v521 = vmul.f32 %v504, %v519
  %v522 = vpack.c.bf16 %v521, %v521
  %524 = vrot.lane.b32.xlu0 %v522, 32
  %v525 = vpop.permute.xlu0 %524
  %v527 = vsel %vm249, %v525, 0
  %529 = vmatprep.subr.bf16.mxu0 0
  %530 = vmatpush1.bf16.msra.mxu0 %v245
  %531 = vmatprep.subr.bf16.mxu0 0
  %532 = vmatpush1.bf16.msra.mxu0 %v246
  %533 = vmatprep.subr.bf16.mxu0 0
  %534 = vmatpush1.bf16.msra.mxu0 0
  %535 = vmatprep.subr.bf16.mxu0 0
  %536 = vmatpush1.bf16.msra.mxu0 0
  %537 = vmatprep.subr.bf16.mxu0 0
  %538 = vmatpush1.bf16.msra.mxu0 0
  %539 = vmatprep.subr.bf16.mxu0 0
  %540 = vmatpush1.bf16.msra.mxu0 0
  %541 = vmatprep.subr.bf16.mxu0 0
  %542 = vmatpush1.bf16.msra.mxu0 0
  %543 = vmatprep.subr.bf16.mxu0 0
  %544 = vmatpush1.bf16.msra.mxu0 0
  %545 = vmatprep.subr.bf16.mxu0 0
  %546 = vmatpush1.bf16.msra.mxu0 0
  %547 = vmatprep.subr.bf16.mxu0 0
  %548 = vmatpush1.bf16.msra.mxu0 0
  %549 = vmatprep.subr.bf16.mxu0 0
  %550 = vmatpush1.bf16.msra.mxu0 0
  %551 = vmatprep.subr.bf16.mxu0 0
  %552 = vmatpush1.bf16.msra.mxu0 0
  %553 = vmatprep.subr.bf16.mxu0 0
  %554 = vmatpush1.bf16.msra.mxu0 0
  %555 = vmatprep.subr.bf16.mxu0 0
  %556 = vmatpush1.bf16.msra.mxu0 0
  %557 = vmatprep.subr.bf16.mxu0 0
  %558 = vmatpush1.bf16.msra.mxu0 0
  %559 = vmatprep.subr.bf16.mxu0 0
  %560 = vmatpush1.bf16.msra.mxu0 0
  %561 = vmatprep.mubr.bf16.mxu0 0
  %562 = vmatmul.mubr.bf16.gmra.mrb[0].mxu0 %v527
  %v563 = vpop.f32.mrb[0].mxu0
  %v564 = vadd.f32 0.0, %v563
  %v565 = vpop.f32.mrb[0].mxu0
  %v566 = vpop.f32.mrb[0].mxu0
  %v567 = vpop.f32.mrb[0].mxu0
  %568 = vdwg.mxu0
  %v569 = vadd.f32 %v214, %v564
  %v570 = vmul.f32 %v569, %v235
  %v571 = vtanh.pop %v570
  %v572 = vmul.f32 %v571, %v235
  %v573 = vadd.f32 %v572, %v236
  %v574 = vmul.f32 %v573, %v515
  %576 = vrot.lane.b32.xlu0 %v573, 64
  %v577 = vpop.permute.xlu0 %576
  %v579 = vmul.f32 %v573, %v577
  %581 = vrot.lane.b32.xlu0 %v579, 32
  %v582 = vpop.permute.xlu0 %581
  %v584 = vadd.f32 %v574, %v582
  %v585 = vtanh.pop %v584
  %587 = vrot.lane.b32.xlu0 %v585, 64
  %v588 = vpop.permute.xlu0 %587
  %v590 = vmul.f32 %v573, %v588
  %v591 = vpack.c.bf16 %v590, %v590
  %593 = vrot.lane.b32.xlu0 %v591, 32
  %v594 = vpop.permute.xlu0 %593
  %v596 = vsel %vm249, %v594, 0
  %598 = vmatprep.subr.bf16.mxu0 0
  %599 = vmatpush1.bf16.msra.mxu0 %v245
  %600 = vmatprep.subr.bf16.mxu0 0
  %601 = vmatpush1.bf16.msra.mxu0 %v246
  %602 = vmatprep.subr.bf16.mxu0 0
  %603 = vmatpush1.bf16.msra.mxu0 0
  %604 = vmatprep.subr.bf16.mxu0 0
  %605 = vmatpush1.bf16.msra.mxu0 0
  %606 = vmatprep.subr.bf16.mxu0 0
  %607 = vmatpush1.bf16.msra.mxu0 0
  %608 = vmatprep.subr.bf16.mxu0 0
  %609 = vmatpush1.bf16.msra.mxu0 0
  %610 = vmatprep.subr.bf16.mxu0 0
  %611 = vmatpush1.bf16.msra.mxu0 0
  %612 = vmatprep.subr.bf16.mxu0 0
  %613 = vmatpush1.bf16.msra.mxu0 0
  %614 = vmatprep.subr.bf16.mxu0 0
  %615 = vmatpush1.bf16.msra.mxu0 0
  %616 = vmatprep.subr.bf16.mxu0 0
  %617 = vmatpush1.bf16.msra.mxu0 0
  %618 = vmatprep.subr.bf16.mxu0 0
  %619 = vmatpush1.bf16.msra.mxu0 0
  %620 = vmatprep.subr.bf16.mxu0 0
  %621 = vmatpush1.bf16.msra.mxu0 0
  %622 = vmatprep.subr.bf16.mxu0 0
  %623 = vmatpush1.bf16.msra.mxu0 0
  %624 = vmatprep.subr.bf16.mxu0 0
  %625 = vmatpush1.bf16.msra.mxu0 0
  %626 = vmatprep.subr.bf16.mxu0 0
  %627 = vmatpush1.bf16.msra.mxu0 0
  %628 = vmatprep.subr.bf16.mxu0 0
  %629 = vmatpush1.bf16.msra.mxu0 0
  %630 = vmatprep.mubr.bf16.mxu0 0
  %631 = vmatmul.mubr.bf16.gmra.mrb[0].mxu0 %v596
  %v632 = vpop.f32.mrb[0].mxu0
  %v633 = vadd.f32 0.0, %v632
  %v634 = vpop.f32.mrb[0].mxu0
  %v635 = vpop.f32.mrb[0].mxu0
  %v636 = vpop.f32.mrb[0].mxu0
  %637 = vdwg.mxu0
  %v638 = vadd.f32 %v217, %v633
  %v639 = vmul.f32 %v638, %v235
  %v640 = vtanh.pop %v639
  %v641 = vmul.f32 %v640, %v235
  %v642 = vadd.f32 %v641, %v236
  %v643 = vmul.f32 %v642, %v584
  %645 = vrot.lane.b32.xlu0 %v642, 64
  %v646 = vpop.permute.xlu0 %645
  %v648 = vmul.f32 %v642, %v646
  %650 = vrot.lane.b32.xlu0 %v648, 32
  %v651 = vpop.permute.xlu0 %650
  %v653 = vadd.f32 %v643, %v651
  %v654 = vtanh.pop %v653
  %656 = vrot.lane.b32.xlu0 %v654, 64
  %v657 = vpop.permute.xlu0 %656
  %v659 = vmul.f32 %v642, %v657
  %v660 = vpack.c.bf16 %v659, %v659
  %662 = vrot.lane.b32.xlu0 %v660, 32
  %v663 = vpop.permute.xlu0 %662
  %v665 = vsel %vm249, %v663, 0
  %667 = vmatprep.subr.bf16.mxu0 0
  %668 = vmatpush1.bf16.msra.mxu0 %v245
  %669 = vmatprep.subr.bf16.mxu0 0
  %670 = vmatpush1.bf16.msra.mxu0 %v246
  %671 = vmatprep.subr.bf16.mxu0 0
  %672 = vmatpush1.bf16.msra.mxu0 0
  %673 = vmatprep.subr.bf16.mxu0 0
  %674 = vmatpush1.bf16.msra.mxu0 0
  %675 = vmatprep.subr.bf16.mxu0 0
  %676 = vmatpush1.bf16.msra.mxu0 0
  %677 = vmatprep.subr.bf16.mxu0 0
  %678 = vmatpush1.bf16.msra.mxu0 0
  %679 = vmatprep.subr.bf16.mxu0 0
  %680 = vmatpush1.bf16.msra.mxu0 0
  %681 = vmatprep.subr.bf16.mxu0 0
  %682 = vmatpush1.bf16.msra.mxu0 0
  %683 = vmatprep.subr.bf16.mxu0 0
  %684 = vmatpush1.bf16.msra.mxu0 0
  %685 = vmatprep.subr.bf16.mxu0 0
  %686 = vmatpush1.bf16.msra.mxu0 0
  %687 = vmatprep.subr.bf16.mxu0 0
  %688 = vmatpush1.bf16.msra.mxu0 0
  %689 = vmatprep.subr.bf16.mxu0 0
  %690 = vmatpush1.bf16.msra.mxu0 0
  %691 = vmatprep.subr.bf16.mxu0 0
  %692 = vmatpush1.bf16.msra.mxu0 0
  %693 = vmatprep.subr.bf16.mxu0 0
  %694 = vmatpush1.bf16.msra.mxu0 0
  %695 = vmatprep.subr.bf16.mxu0 0
  %696 = vmatpush1.bf16.msra.mxu0 0
  %697 = vmatprep.subr.bf16.mxu0 0
  %698 = vmatpush1.bf16.msra.mxu0 0
  %699 = vmatprep.mubr.bf16.mxu0 0
  %700 = vmatmul.mubr.bf16.gmra.mrb[0].mxu0 %v665
  %v701 = vpop.f32.mrb[0].mxu0
  %v702 = vadd.f32 0.0, %v701
  %v703 = vpop.f32.mrb[0].mxu0
  %v704 = vpop.f32.mrb[0].mxu0
  %v705 = vpop.f32.mrb[0].mxu0
  %706 = vdwg.mxu0
  %v707 = vadd.f32 %v222, %v702
  %v708 = vmul.f32 %v707, %v235
  %v709 = vtanh.pop %v708
  %v710 = vmul.f32 %v709, %v235
  %v711 = vadd.f32 %v710, %v236
  %v712 = vmul.f32 %v711, %v653
  %714 = vrot.lane.b32.xlu0 %v711, 64
  %v715 = vpop.permute.xlu0 %714
  %v717 = vmul.f32 %v711, %v715
  %719 = vrot.lane.b32.xlu0 %v717, 32
  %v720 = vpop.permute.xlu0 %719
  %v722 = vadd.f32 %v712, %v720
  %v723 = vtanh.pop %v722
  %725 = vrot.lane.b32.xlu0 %v723, 64
  %v726 = vpop.permute.xlu0 %725
  %v728 = vmul.f32 %v711, %v726
  %v729 = vpack.c.bf16 %v728, %v728
  %731 = vrot.lane.b32.xlu0 %v729, 32
  %v732 = vpop.permute.xlu0 %731
  %v734 = vsel %vm249, %v732, 0
  %736 = vmatprep.subr.bf16.mxu0 0
  %737 = vmatpush1.bf16.msra.mxu0 %v245
  %738 = vmatprep.subr.bf16.mxu0 0
  %739 = vmatpush1.bf16.msra.mxu0 %v246
  %740 = vmatprep.subr.bf16.mxu0 0
  %741 = vmatpush1.bf16.msra.mxu0 0
  %742 = vmatprep.subr.bf16.mxu0 0
  %743 = vmatpush1.bf16.msra.mxu0 0
  %744 = vmatprep.subr.bf16.mxu0 0
  %745 = vmatpush1.bf16.msra.mxu0 0
  %746 = vmatprep.subr.bf16.mxu0 0
  %747 = vmatpush1.bf16.msra.mxu0 0
  %748 = vmatprep.subr.bf16.mxu0 0
  %749 = vmatpush1.bf16.msra.mxu0 0
  %750 = vmatprep.subr.bf16.mxu0 0
  %751 = vmatpush1.bf16.msra.mxu0 0
  %752 = vmatprep.subr.bf16.mxu0 0
  %753 = vmatpush1.bf16.msra.mxu0 0
  %754 = vmatprep.subr.bf16.mxu0 0
  %755 = vmatpush1.bf16.msra.mxu0 0
  %756 = vmatprep.subr.bf16.mxu0 0
  %757 = vmatpush1.bf16.msra.mxu0 0
  %758 = vmatprep.subr.bf16.mxu0 0
  %759 = vmatpush1.bf16.msra.mxu0 0
  %760 = vmatprep.subr.bf16.mxu0 0
  %761 = vmatpush1.bf16.msra.mxu0 0
  %762 = vmatprep.subr.bf16.mxu0 0
  %763 = vmatpush1.bf16.msra.mxu0 0
  %764 = vmatprep.subr.bf16.mxu0 0
  %765 = vmatpush1.bf16.msra.mxu0 0
  %766 = vmatprep.subr.bf16.mxu0 0
  %767 = vmatpush1.bf16.msra.mxu0 0
  %768 = vmatprep.mubr.bf16.mxu0 0
  %769 = vmatmul.mubr.bf16.gmra.mrb[0].mxu0 %v734
  %v770 = vpop.f32.mrb[0].mxu0
  %v771 = vadd.f32 0.0, %v770
  %v772 = vpop.f32.mrb[0].mxu0
  %v773 = vpop.f32.mrb[0].mxu0
  %v774 = vpop.f32.mrb[0].mxu0
  %775 = vdwg.mxu0
  %v776 = vadd.f32 %v225, %v771
  %v777 = vmul.f32 %v776, %v235
  %v778 = vtanh.pop %v777
  %v779 = vmul.f32 %v778, %v235
  %v780 = vadd.f32 %v779, %v236
  %v781 = vmul.f32 %v780, %v722
  %783 = vrot.lane.b32.xlu0 %v780, 64
  %v784 = vpop.permute.xlu0 %783
  %v786 = vmul.f32 %v780, %v784
  %788 = vrot.lane.b32.xlu0 %v786, 32
  %v789 = vpop.permute.xlu0 %788
  %v791 = vadd.f32 %v781, %v789
  %v792 = vtanh.pop %v791
  %794 = vrot.lane.b32.xlu0 %v792, 64
  %v795 = vpop.permute.xlu0 %794
  %v797 = vmul.f32 %v780, %v795
  %v798 = vpack.c.bf16 %v383, %v314
  %v799 = vpack.c.bf16 %v521, %v452
  %v800 = vpack.c.bf16 %v659, %v590
  %v801 = vpack.c.bf16 %v797, %v728
  %v802 = vld [vmem:[%s5] sm:$0xf]
  %v803 = vld [vmem:[%s5 + $0x4] sm:$0xf]
  %v804 = vld [vmem:[%s5 + $0x8] sm:$0xf]
  %v805 = vld [vmem:[%s5 + $0xc] sm:$0xf]
  %v806 = vld [vmem:[%s6] sm:$0x1]
  %v808 = vlaneseq
  %v809 = vshrl.u32 %v808, 7
  %v810 = vsub.s32 0, %v809
  %v811 = vrot.slane %v806, %v810
  %817 = vrot.lane.b32.xlu0 %v798, 32
  %v818 = vpop.permute.xlu0 %817
  %819 = vrot.lane.b32.xlu0 %v799, 32
  %v820 = vpop.permute.xlu0 %819
  %821 = vrot.lane.b32.xlu0 %v800, 32
  %v822 = vpop.permute.xlu0 %821
  %823 = vrot.lane.b32.xlu0 %v801, 32
  %v824 = vpop.permute.xlu0 %823
  %v829 = vunpack.c.l.b16 %v802
  %v830 = vunpack.c.l.b16 %v803
  %v831 = vunpack.c.l.b16 %v804
  %v832 = vunpack.c.l.b16 %v805
  %v833 = vpack.c.b16 %v830, %v829
  %v834 = vpack.c.b16 %v832, %v831
  %v838 = vsel %vm249, %v818, 0
  %v841 = vsel %vm249, %v820, 0
  %v844 = vsel %vm249, %v822, 0
  %v847 = vsel %vm249, %v824, 0
  %849 = vmatprep.subr.bf16.mxu0 0
  %850 = vmatpush1.bf16.msra.mxu0 %v833
  %851 = vmatprep.subr.bf16.mxu0 0
  %852 = vmatpush1.bf16.msra.mxu0 %v834
  %853 = vmatprep.subr.bf16.mxu0 0
  %854 = vmatpush1.bf16.msra.mxu0 0
  %855 = vmatprep.subr.bf16.mxu0 0
  %856 = vmatpush1.bf16.msra.mxu0 0
  %857 = vmatprep.subr.bf16.mxu0 0
  %858 = vmatpush1.bf16.msra.mxu0 0
  %859 = vmatprep.subr.bf16.mxu0 0
  %860 = vmatpush1.bf16.msra.mxu0 0
  %861 = vmatprep.subr.bf16.mxu0 0
  %862 = vmatpush1.bf16.msra.mxu0 0
  %863 = vmatprep.subr.bf16.mxu0 0
  %864 = vmatpush1.bf16.msra.mxu0 0
  %865 = vmatprep.subr.bf16.mxu0 0
  %866 = vmatpush1.bf16.msra.mxu0 0
  %867 = vmatprep.subr.bf16.mxu0 0
  %868 = vmatpush1.bf16.msra.mxu0 0
  %869 = vmatprep.subr.bf16.mxu0 0
  %870 = vmatpush1.bf16.msra.mxu0 0
  %871 = vmatprep.subr.bf16.mxu0 0
  %872 = vmatpush1.bf16.msra.mxu0 0
  %873 = vmatprep.subr.bf16.mxu0 0
  %874 = vmatpush1.bf16.msra.mxu0 0
  %875 = vmatprep.subr.bf16.mxu0 0
  %876 = vmatpush1.bf16.msra.mxu0 0
  %877 = vmatprep.subr.bf16.mxu0 0
  %878 = vmatpush1.bf16.msra.mxu0 0
  %879 = vmatprep.subr.bf16.mxu0 0
  %880 = vmatpush1.bf16.msra.mxu0 0
  %881 = vmatprep.mubr.bf16.mxu0 0
  %882 = vmatmul.mubr.bf16.gmra.mrb[0].mxu0 %v838
  %v883 = vpop.f32.mrb[0].mxu0
  %v884 = vadd.f32 %v811, %v883
  %v885 = vpop.f32.mrb[0].mxu0
  %v886 = vpop.f32.mrb[0].mxu0
  %v887 = vadd.f32 %v811, %v886
  %v888 = vpop.f32.mrb[0].mxu0
  %889 = vmatprep.mubr.bf16.mxu0 0
  %890 = vmatmul.mubr.bf16.gmra.mrb[0].mxu0 %v841
  %v891 = vpop.f32.mrb[0].mxu0
  %v892 = vadd.f32 %v811, %v891
  %v893 = vpop.f32.mrb[0].mxu0
  %v894 = vpop.f32.mrb[0].mxu0
  %v895 = vadd.f32 %v811, %v894
  %v896 = vpop.f32.mrb[0].mxu0
  %897 = vmatprep.mubr.bf16.mxu0 0
  %898 = vmatmul.mubr.bf16.gmra.mrb[0].mxu0 %v844
  %v899 = vpop.f32.mrb[0].mxu0
  %v900 = vadd.f32 %v811, %v899
  %v901 = vpop.f32.mrb[0].mxu0
  %v902 = vpop.f32.mrb[0].mxu0
  %v903 = vadd.f32 %v811, %v902
  %v904 = vpop.f32.mrb[0].mxu0
  %905 = vmatprep.mubr.bf16.mxu0 0
  %906 = vmatmul.mubr.bf16.gmra.mrb[0].mxu0 %v847
  %v907 = vpop.f32.mrb[0].mxu0
  %v908 = vadd.f32 %v811, %v907
  %v909 = vpop.f32.mrb[0].mxu0
  %v910 = vpop.f32.mrb[0].mxu0
  %v911 = vadd.f32 %v811, %v910
  %v912 = vpop.f32.mrb[0].mxu0
  %913 = vdwg.mxu0
  %914 = vmax.xlane.f32.xlu0 %v884
  %v915 = vpop.xlane.xlu0 %914
  %916 = vmax.xlane.f32.xlu0 %v887
  %v917 = vpop.xlane.xlu0 %916
  %918 = vmax.xlane.f32.xlu0 %v892
  %v919 = vpop.xlane.xlu0 %918
  %920 = vmax.xlane.f32.xlu0 %v895
  %v921 = vpop.xlane.xlu0 %920
  %922 = vmax.xlane.f32.xlu0 %v900
  %v923 = vpop.xlane.xlu0 %922
  %924 = vmax.xlane.f32.xlu0 %v903
  %v925 = vpop.xlane.xlu0 %924
  %926 = vmax.xlane.f32.xlu0 %v908
  %v927 = vpop.xlane.xlu0 %926
  %928 = vmax.xlane.f32.xlu0 %v911
  %v929 = vpop.xlane.xlu0 %928
  %v930 = vsub.f32 %v884, %v915
  %v931 = vsub.f32 %v887, %v917
  %v932 = vsub.f32 %v892, %v919
  %v933 = vsub.f32 %v895, %v921
  %v934 = vsub.f32 %v900, %v923
  %v935 = vsub.f32 %v903, %v925
  %v936 = vsub.f32 %v908, %v927
  %v937 = vsub.f32 %v911, %v929
  %v938 = vmul.f32 %v930, 1.442695
  %v939 = vpow.pop %v938
  %v940 = vmul.f32 %v931, 1.442695
  %v941 = vpow.pop %v940
  %v942 = vmul.f32 %v932, 1.442695
  %v943 = vpow.pop %v942
  %v944 = vmul.f32 %v933, 1.442695
  %v945 = vpow.pop %v944
  %v946 = vmul.f32 %v934, 1.442695
  %v947 = vpow.pop %v946
  %v948 = vmul.f32 %v935, 1.442695
  %v949 = vpow.pop %v948
  %v950 = vmul.f32 %v936, 1.442695
  %v951 = vpow.pop %v950
  %v952 = vmul.f32 %v937, 1.442695
  %v953 = vpow.pop %v952
  %954 = vadd.xlane.f32.xlu0 %v939
  %v955 = vpop.xlane.xlu0 %954
  %956 = vadd.xlane.f32.xlu0 %v941
  %v957 = vpop.xlane.xlu0 %956
  %958 = vadd.xlane.f32.xlu0 %v943
  %v959 = vpop.xlane.xlu0 %958
  %960 = vadd.xlane.f32.xlu0 %v945
  %v961 = vpop.xlane.xlu0 %960
  %962 = vadd.xlane.f32.xlu0 %v947
  %v963 = vpop.xlane.xlu0 %962
  %964 = vadd.xlane.f32.xlu0 %v949
  %v965 = vpop.xlane.xlu0 %964
  %966 = vadd.xlane.f32.xlu0 %v951
  %v967 = vpop.xlane.xlu0 %966
  %968 = vadd.xlane.f32.xlu0 %v953
  %v969 = vpop.xlane.xlu0 %968
  %v970 = vlog2.pop %v955
  %v971 = vmul.f32 %v970, 0.6931472
  %v972 = vlog2.pop %v957
  %v973 = vmul.f32 %v972, 0.6931472
  %v974 = vlog2.pop %v959
  %v975 = vmul.f32 %v974, 0.6931472
  %v976 = vlog2.pop %v961
  %v977 = vmul.f32 %v976, 0.6931472
  %v978 = vlog2.pop %v963
  %v979 = vmul.f32 %v978, 0.6931472
  %v980 = vlog2.pop %v965
  %v981 = vmul.f32 %v980, 0.6931472
  %v982 = vlog2.pop %v967
  %v983 = vmul.f32 %v982, 0.6931472
  %v984 = vlog2.pop %v969
  %v985 = vmul.f32 %v984, 0.6931472
  %986 = vadd.xlane.f32.xlu0 %v930
  %v987 = vpop.xlane.xlu0 %986
  %988 = vadd.xlane.f32.xlu0 %v931
  %v989 = vpop.xlane.xlu0 %988
  %990 = vadd.xlane.f32.xlu0 %v932
  %v991 = vpop.xlane.xlu0 %990
  %992 = vadd.xlane.f32.xlu0 %v933
  %v993 = vpop.xlane.xlu0 %992
  %994 = vadd.xlane.f32.xlu0 %v934
  %v995 = vpop.xlane.xlu0 %994
  %996 = vadd.xlane.f32.xlu0 %v935
  %v997 = vpop.xlane.xlu0 %996
  %998 = vadd.xlane.f32.xlu0 %v936
  %v999 = vpop.xlane.xlu0 %998
  %1000 = vadd.xlane.f32.xlu0 %v937
  %v1001 = vpop.xlane.xlu0 %1000
  %vm1002 = vcmp.ne.s32.totalorder %v30, 4294967295
  %vm1003 = vcmp.ne.s32.totalorder %v31, 4294967295
  %vm1004 = vcmp.ne.s32.totalorder %v32, 4294967295
  %vm1005 = vcmp.ne.s32.totalorder %v33, 4294967295
  %vm1006 = vcmp.ne.s32.totalorder %v34, 4294967295
  %vm1007 = vcmp.ne.s32.totalorder %v35, 4294967295
  %vm1008 = vcmp.ne.s32.totalorder %v36, 4294967295
  %vm1009 = vcmp.ne.s32.totalorder %v37, 4294967295
  %v1010 = vsel %vm1002, 1, 0
  %v1011 = vsel %vm1003, 1, 0
  %v1012 = vsel %vm1004, 1, 0
  %v1013 = vsel %vm1005, 1, 0
  %v1014 = vsel %vm1006, 1, 0
  %v1015 = vsel %vm1007, 1, 0
  %v1016 = vsel %vm1008, 1, 0
  %v1017 = vsel %vm1009, 1, 0
  %v1018 = vcvt.s32.f32 %v1010
  %v1019 = vcvt.s32.f32 %v1011
  %v1020 = vcvt.s32.f32 %v1012
  %v1021 = vcvt.s32.f32 %v1013
  %v1022 = vcvt.s32.f32 %v1014
  %v1023 = vcvt.s32.f32 %v1015
  %v1024 = vcvt.s32.f32 %v1016
  %v1025 = vcvt.s32.f32 %v1017
  %vm1026 = vcmp.eq.s32.totalorder %v30, 4294967295
  %vm1027 = vcmp.eq.s32.totalorder %v31, 4294967295
  %vm1028 = vcmp.eq.s32.totalorder %v32, 4294967295
  %vm1029 = vcmp.eq.s32.totalorder %v33, 4294967295
  %vm1030 = vcmp.eq.s32.totalorder %v34, 4294967295
  %vm1031 = vcmp.eq.s32.totalorder %v35, 4294967295
  %vm1032 = vcmp.eq.s32.totalorder %v36, 4294967295
  %vm1033 = vcmp.eq.s32.totalorder %v37, 4294967295
  %v1034 = vsel %vm1026, 0, %v30
  %v1035 = vsel %vm1027, 0, %v31
  %v1036 = vsel %vm1028, 0, %v32
  %v1037 = vsel %vm1029, 0, %v33
  %v1038 = vsel %vm1030, 0, %v34
  %v1039 = vsel %vm1031, 0, %v35
  %v1040 = vsel %vm1032, 0, %v36
  %v1041 = vsel %vm1033, 0, %v37
  %1042 = vset.pattern.permute.xlu0 1
  %1043 = vperm.xlu0 %1042, %v1034
  %v1044 = vpop.permute.xlu0 %1043
  %1045 = vset.pattern.permute.xlu0 1
  %1046 = vperm.xlu0 %1045, %v1035
  %v1047 = vpop.permute.xlu0 %1046
  %1048 = vset.pattern.permute.xlu0 1
  %1049 = vperm.xlu0 %1048, %v1036
  %v1050 = vpop.permute.xlu0 %1049
  %1051 = vset.pattern.permute.xlu0 1
  %1052 = vperm.xlu0 %1051, %v1037
  %v1053 = vpop.permute.xlu0 %1052
  %1054 = vset.pattern.permute.xlu0 1
  %1055 = vperm.xlu0 %1054, %v1038
  %v1056 = vpop.permute.xlu0 %1055
  %1057 = vset.pattern.permute.xlu0 1
  %1058 = vperm.xlu0 %1057, %v1039
  %v1059 = vpop.permute.xlu0 %1058
  %1060 = vset.pattern.permute.xlu0 1
  %1061 = vperm.xlu0 %1060, %v1040
  %v1062 = vpop.permute.xlu0 %1061
  %1063 = vset.pattern.permute.xlu0 1
  %1064 = vperm.xlu0 %1063, %v1041
  %v1065 = vpop.permute.xlu0 %1064
  %vm1066 = vcmp.eq.s32.totalorder %v39, %v1044
  %vm1067 = vcmp.eq.s32.totalorder %v39, %v1047
  %vm1068 = vcmp.eq.s32.totalorder %v39, %v1050
  %vm1069 = vcmp.eq.s32.totalorder %v39, %v1053
  %vm1070 = vcmp.eq.s32.totalorder %v39, %v1056
  %vm1071 = vcmp.eq.s32.totalorder %v39, %v1059
  %vm1072 = vcmp.eq.s32.totalorder %v39, %v1062
  %vm1073 = vcmp.eq.s32.totalorder %v39, %v1065
  %v1074 = vsel %vm1066, 1, 0
  %v1075 = vsel %vm1067, 1, 0
  %v1076 = vsel %vm1068, 1, 0
  %v1077 = vsel %vm1069, 1, 0
  %v1078 = vsel %vm1070, 1, 0
  %v1079 = vsel %vm1071, 1, 0
  %v1080 = vsel %vm1072, 1, 0
  %v1081 = vsel %vm1073, 1, 0
  %v1082 = vcvt.s32.f32 %v1074
  %v1083 = vcvt.s32.f32 %v1075
  %v1084 = vcvt.s32.f32 %v1076
  %v1085 = vcvt.s32.f32 %v1077
  %v1086 = vcvt.s32.f32 %v1078
  %v1087 = vcvt.s32.f32 %v1079
  %v1088 = vcvt.s32.f32 %v1080
  %v1089 = vcvt.s32.f32 %v1081
  %v1090 = vmul.f32 %v1082, %v930
  %v1091 = vmul.f32 %v1083, %v931
  %v1092 = vmul.f32 %v1084, %v932
  %v1093 = vmul.f32 %v1085, %v933
  %v1094 = vmul.f32 %v1086, %v934
  %v1095 = vmul.f32 %v1087, %v935
  %v1096 = vmul.f32 %v1088, %v936
  %v1097 = vmul.f32 %v1089, %v937
  %1098 = vadd.xlane.f32.xlu0 %v1090
  %v1099 = vpop.xlane.xlu0 %1098
  %1100 = vadd.xlane.f32.xlu0 %v1091
  %v1101 = vpop.xlane.xlu0 %1100
  %1102 = vadd.xlane.f32.xlu0 %v1092
  %v1103 = vpop.xlane.xlu0 %1102
  %1104 = vadd.xlane.f32.xlu0 %v1093
  %v1105 = vpop.xlane.xlu0 %1104
  %1106 = vadd.xlane.f32.xlu0 %v1094
  %v1107 = vpop.xlane.xlu0 %1106
  %1108 = vadd.xlane.f32.xlu0 %v1095
  %v1109 = vpop.xlane.xlu0 %1108
  %1110 = vadd.xlane.f32.xlu0 %v1096
  %v1111 = vpop.xlane.xlu0 %1110
  %1112 = vadd.xlane.f32.xlu0 %v1097
  %v1113 = vpop.xlane.xlu0 %1112
  %v1114 = vsub.f32 %v1099, %v971
  %v1115 = vsub.f32 %v1101, %v973
  %v1116 = vsub.f32 %v1103, %v975
  %v1117 = vsub.f32 %v1105, %v977
  %v1118 = vsub.f32 %v1107, %v979
  %v1119 = vsub.f32 %v1109, %v981
  %v1120 = vsub.f32 %v1111, %v983
  %v1121 = vsub.f32 %v1113, %v985
  %v1122 = vmul.f32 %v971, 128.0
  %v1123 = vmul.f32 %v973, 128.0
  %v1124 = vmul.f32 %v975, 128.0
  %v1125 = vmul.f32 %v977, 128.0
  %v1126 = vmul.f32 %v979, 128.0
  %v1127 = vmul.f32 %v981, 128.0
  %v1128 = vmul.f32 %v983, 128.0
  %v1129 = vmul.f32 %v985, 128.0
  %v1130 = vsub.f32 %v987, %v1122
  %v1131 = vsub.f32 %v989, %v1123
  %v1132 = vsub.f32 %v991, %v1124
  %v1133 = vsub.f32 %v993, %v1125
  %v1134 = vsub.f32 %v995, %v1126
  %v1135 = vsub.f32 %v997, %v1127
  %v1136 = vsub.f32 %v999, %v1128
  %v1137 = vsub.f32 %v1001, %v1129
  %v1138 = vmul.f32 %v1114, 0.8992126
  %v1139 = vmul.f32 %v1115, 0.8992126
  %v1140 = vmul.f32 %v1116, 0.8992126
  %v1141 = vmul.f32 %v1117, 0.8992126
  %v1142 = vmul.f32 %v1118, 0.8992126
  %v1143 = vmul.f32 %v1119, 0.8992126
  %v1144 = vmul.f32 %v1120, 0.8992126
  %v1145 = vmul.f32 %v1121, 0.8992126
  %v1146 = vsub.f32 -0.8095017, %v1138
  %v1147 = vsub.f32 -0.8095017, %v1139
  %v1148 = vsub.f32 -0.8095017, %v1140
  %v1149 = vsub.f32 -0.8095017, %v1141
  %v1150 = vsub.f32 -0.8095017, %v1142
  %v1151 = vsub.f32 -0.8095017, %v1143
  %v1152 = vsub.f32 -0.8095017, %v1144
  %v1153 = vsub.f32 -0.8095017, %v1145
  %v1154 = vmul.f32 %v1130, 0.0007874016
  %v1155 = vmul.f32 %v1131, 0.0007874016
  %v1156 = vmul.f32 %v1132, 0.0007874016
  %v1157 = vmul.f32 %v1133, 0.0007874016
  %v1158 = vmul.f32 %v1134, 0.0007874016
  %v1159 = vmul.f32 %v1135, 0.0007874016
  %v1160 = vmul.f32 %v1136, 0.0007874016
  %v1161 = vmul.f32 %v1137, 0.0007874016
  %v1162 = vsub.f32 %v1146, %v1154
  %v1163 = vsub.f32 %v1147, %v1155
  %v1164 = vsub.f32 %v1148, %v1156
  %v1165 = vsub.f32 %v1149, %v1157
  %v1166 = vsub.f32 %v1150, %v1158
  %v1167 = vsub.f32 %v1151, %v1159
  %v1168 = vsub.f32 %v1152, %v1160
  %v1169 = vsub.f32 %v1153, %v1161
  %v1170 = vmul.f32 %v1162, %v1018
  %v1171 = vmul.f32 %v1163, %v1019
  %v1172 = vmul.f32 %v1164, %v1020
  %v1173 = vmul.f32 %v1165, %v1021
  %v1174 = vmul.f32 %v1166, %v1022
  %v1175 = vmul.f32 %v1167, %v1023
  %v1176 = vmul.f32 %v1168, %v1024
  %v1177 = vmul.f32 %v1169, %v1025
  %v1178 = vlaneseq
  %v1179 = vshrl.u32 %v1178, 7
  %v1180 = vadd.s32 %v1179, 8
  %v1181 = vadd.s32 %v1179, 16
  %v1182 = vadd.s32 %v1179, 24
  %v1183 = vadd.s32 %v1179, 32
  %v1184 = vadd.s32 %v1179, 40
  %v1185 = vadd.s32 %v1179, 48
  %v1186 = vadd.s32 %v1179, 56
  %v1187 = vand.u32 %v1179, 7
  %v1188 = vand.u32 %v1180, 7
  %v1189 = vand.u32 %v1181, 7
  %v1190 = vand.u32 %v1182, 7
  %v1191 = vand.u32 %v1183, 7
  %v1192 = vand.u32 %v1184, 7
  %v1193 = vand.u32 %v1185, 7
  %v1194 = vand.u32 %v1186, 7
  %vm1195 = vcmp.eq.s32.totalorder %v1187, %v39
  %vm1196 = vcmp.eq.s32.totalorder %v1188, %v39
  %vm1197 = vcmp.eq.s32.totalorder %v1189, %v39
  %vm1198 = vcmp.eq.s32.totalorder %v1190, %v39
  %vm1199 = vcmp.eq.s32.totalorder %v1191, %v39
  %vm1200 = vcmp.eq.s32.totalorder %v1192, %v39
  %vm1201 = vcmp.eq.s32.totalorder %v1193, %v39
  %vm1202 = vcmp.eq.s32.totalorder %v1194, %v39
  %v1203 = vsel %vm1195, 1, 0
  %v1204 = vsel %vm1196, 1, 0
  %v1205 = vsel %vm1197, 1, 0
  %v1206 = vsel %vm1198, 1, 0
  %v1207 = vsel %vm1199, 1, 0
  %v1208 = vsel %vm1200, 1, 0
  %v1209 = vsel %vm1201, 1, 0
  %v1210 = vsel %vm1202, 1, 0
  %v1211 = vcvt.s32.f32 %v1203
  %v1212 = vcvt.s32.f32 %v1204
  %v1213 = vcvt.s32.f32 %v1205
  %v1214 = vcvt.s32.f32 %v1206
  %v1215 = vcvt.s32.f32 %v1207
  %v1216 = vcvt.s32.f32 %v1208
  %v1217 = vcvt.s32.f32 %v1209
  %v1218 = vcvt.s32.f32 %v1210
  %1220 = vset.pattern.permute.xlu0 1
  %1221 = vperm.xlu0 %1220, %v1170
  %v1222 = vpop.permute.xlu0 %1221
  %1225 = vset.pattern.permute.xlu0 1
  %1226 = vperm.xlu0 %1225, %v1171
  %v1227 = vpop.permute.xlu0 %1226
  %1230 = vset.pattern.permute.xlu0 1
  %1231 = vperm.xlu0 %1230, %v1172
  %v1232 = vpop.permute.xlu0 %1231
  %1235 = vset.pattern.permute.xlu0 1
  %1236 = vperm.xlu0 %1235, %v1173
  %v1237 = vpop.permute.xlu0 %1236
  %1240 = vset.pattern.permute.xlu0 1
  %1241 = vperm.xlu0 %1240, %v1174
  %v1242 = vpop.permute.xlu0 %1241
  %1245 = vset.pattern.permute.xlu0 1
  %1246 = vperm.xlu0 %1245, %v1175
  %v1247 = vpop.permute.xlu0 %1246
  %1250 = vset.pattern.permute.xlu0 1
  %1251 = vperm.xlu0 %1250, %v1176
  %v1252 = vpop.permute.xlu0 %1251
  %1255 = vset.pattern.permute.xlu0 1
  %1256 = vperm.xlu0 %1255, %v1177
  %v1257 = vpop.permute.xlu0 %1256
  %v1259 = vmul.f32 %v1222, %v1211
  %v1260 = vmul.f32 %v1227, %v1212
  %v1261 = vmul.f32 %v1232, %v1213
  %v1262 = vmul.f32 %v1237, %v1214
  %v1263 = vmul.f32 %v1242, %v1215
  %v1264 = vmul.f32 %v1247, %v1216
  %v1265 = vmul.f32 %v1252, %v1217
  %v1266 = vmul.f32 %v1257, %v1218
  %v1267 = vadd.f32 %v1259, %v1260
  %v1268 = vadd.f32 %v1267, %v1261
  %v1269 = vadd.f32 %v1268, %v1262
  %v1270 = vadd.f32 %v1269, %v1263
  %v1271 = vadd.f32 %v1270, %v1264
  %v1272 = vadd.f32 %v1271, %v1265
  %v1273 = vadd.f32 %v1272, %v1266
  %v1274 = vrot.slane %v1273, 4
  %v1275 = vadd.f32 %v1273, %v1274
  %v1276 = vrot.slane %v1275, 2
  %v1277 = vadd.f32 %v1275, %v1276
  %v1278 = vrot.slane %v1277, 1
  %v1279 = vadd.f32 %v1277, %v1278
  %1281 = vset.pattern.permute.xlu0 1
  %1282 = vperm.xlu0 %1281, %v1018
  %v1283 = vpop.permute.xlu0 %1282
  %1286 = vset.pattern.permute.xlu0 1
  %1287 = vperm.xlu0 %1286, %v1019
  %v1288 = vpop.permute.xlu0 %1287
  %1291 = vset.pattern.permute.xlu0 1
  %1292 = vperm.xlu0 %1291, %v1020
  %v1293 = vpop.permute.xlu0 %1292
  %1296 = vset.pattern.permute.xlu0 1
  %1297 = vperm.xlu0 %1296, %v1021
  %v1298 = vpop.permute.xlu0 %1297
  %1301 = vset.pattern.permute.xlu0 1
  %1302 = vperm.xlu0 %1301, %v1022
  %v1303 = vpop.permute.xlu0 %1302
  %1306 = vset.pattern.permute.xlu0 1
  %1307 = vperm.xlu0 %1306, %v1023
  %v1308 = vpop.permute.xlu0 %1307
  %1311 = vset.pattern.permute.xlu0 1
  %1312 = vperm.xlu0 %1311, %v1024
  %v1313 = vpop.permute.xlu0 %1312
  %1316 = vset.pattern.permute.xlu0 1
  %1317 = vperm.xlu0 %1316, %v1025
  %v1318 = vpop.permute.xlu0 %1317
  %v1320 = vmul.f32 %v1283, %v1211
  %v1321 = vmul.f32 %v1288, %v1212
  %v1322 = vmul.f32 %v1293, %v1213
  %v1323 = vmul.f32 %v1298, %v1214
  %v1324 = vmul.f32 %v1303, %v1215
  %v1325 = vmul.f32 %v1308, %v1216
  %v1326 = vmul.f32 %v1313, %v1217
  %v1327 = vmul.f32 %v1318, %v1218
  %v1328 = vadd.f32 %v1320, %v1321
  %v1329 = vadd.f32 %v1328, %v1322
  %v1330 = vadd.f32 %v1329, %v1323
  %v1331 = vadd.f32 %v1330, %v1324
  %v1332 = vadd.f32 %v1331, %v1325
  %v1333 = vadd.f32 %v1332, %v1326
  %v1334 = vadd.f32 %v1333, %v1327
  %v1335 = vrot.slane %v1334, 4
  %v1336 = vadd.f32 %v1334, %v1335
  %v1337 = vrot.slane %v1336, 2
  %v1338 = vadd.f32 %v1336, %v1337
  %v1339 = vrot.slane %v1338, 1
  %v1340 = vadd.f32 %v1338, %v1339
  %1341 = vadd.xlane.f32.xlu0 %v1279
  %v1342 = vpop.xlane.xlu0 %1341
  %s1343 = sld [smem:[#allocation2]]
  %v1344 = vmul.f32 %v1342, 0.25
  %v1345 = vmul.f32 %v1344, 4.0
  %v1346 = vstv %s1343
  %v1347 = vrcp.pop %v1346
  %v1348 = vmul.f32 %v1345, %v1347
  %v1349 = vmul.f32 %v1348, 1.442695
  %v1350 = vpow.pop %v1349
  %v1351 = vmax.f32 %v1340, 1.0
  %v1352 = vrcp.pop %v1351
  %v1353 = vmul.f32 %v1279, %v1352
  %v1354 = vmul.f32 %v1353, 1.442695
  %v1355 = vpow.pop %v1354
  %1356 = vst [vmem:[%s8] sm:$0x1] %v1355
  %vm1357 = vcmp.eq.s32.totalorder %v39, 0
  %v1358 = vsel %vm1357, %v1344, 0.0
  %vm1359 = vcmp.eq.s32.totalorder %v39, 1
  %v1360 = vsel %vm1359, %v1350, 0.0
  %v1361 = vadd.f32 %v1358, %v1360
  %vm1362 = vcmp.eq.s32.totalorder %v39, 2
  %v1363 = vsel %vm1362, %v1346, 0.0
  %v1364 = vadd.f32 %v1361, %v1363
  %1365 = vst [vmem:[%s7] sm:$0x1] %v1364
  // Predicated region
  $region30: #{rnnlm_forward.1} parent=0 // pred_check
    _
  $region31: #{rnnlm_forward.1} parent=0 // pred_check_branch
    %1367 = sbr.rel (0) target = $region33
  $region32: #{rnnlm_forward.1} parent=0 // pred_region
    _
  $region33: #{rnnlm_forward.1} parent=0 // pred_fallthru
    _
  // Predicated region
  $region34: #{rnnlm_forward.1} parent=0 // pred_check
    _
  $region35: #{rnnlm_forward.1} parent=0 // pred_check_branch
    %1369 = sbr.rel (0) target = $region37
  $region36: #{rnnlm_forward.1} parent=0 // pred_region
    _
  $region37: #{rnnlm_forward.1} parent=0 // pred_fallthru
    _
  // Predicated region
  $region38: #{rnnlm_forward.1} parent=0 // pred_check
    _
  $region39: #{rnnlm_forward.1} parent=0 // pred_check_branch
    %1371 = sbr.rel (0) target = $region41
  $region40: #{rnnlm_forward.1} parent=0 // pred_region
    _
  $region41: #{rnnlm_forward.1} parent=0 // pred_fallthru
    _
  // Predicated region
  $region42: #{rnnlm_forward.1} parent=0 // pred_check
    _
  $region43: #{rnnlm_forward.1} parent=0 // pred_check_branch
    %1373 = sbr.rel (0) target = $region45
  $region44: #{rnnlm_forward.1} parent=0 // pred_region
    _
  $region45: #{rnnlm_forward.1} parent=0 // pred_fallthru
    _

</llo_original>
